<compile_context>
chip_gen: v5e
topology: v5e:2x2
jax: 0.10.0
libtpu: 0.0.40
codegen_flags: <defaults>
</compile_context>

<pallas_src>
from functools import partial

import jax
import jax.numpy as jnp
from jax.experimental import pallas as pl
from jax.experimental.pallas import tpu as pltpu

N_NODES = 514  # hard-coded in the module: nn.Parameter(torch.FloatTensor(514, f_in))

_SUBLANE = 8
_LANE = 128


def _round_up(x, m):
    return (x + m - 1) // m * m


def _default_num_row_blocks():
    """2 row-blocks (one per TensorCore) on v7x; single step elsewhere."""
    try:
        kind = jax.devices()[0].device_kind.lower()
    except Exception:
        return 1
    return 2 if ("v7" in kind or "tpu7" in kind) else 1


def gw_graph_conv_kernel(x_ref, gwr_ref, adj_ref, w_ref, b_ref, o_ref):
    f_in = x_ref.shape[1]
    f_out = w_ref.shape[1]

    # Geographically-weighted scaling in f32 on the VPU.
    gwr_support = x_ref[...] * gwr_ref[...]                         # (K_pad, f_in) f32

    if f_in <= f_out:
        # Big matmul produces the narrower f_in columns first.
        support = jnp.dot(adj_ref[...],                              # bf16
                          gwr_support.astype(jnp.bfloat16),
                          preferred_element_type=jnp.float32)        # (rows, f_in) f32
        out = jnp.dot(support, w_ref[...],
                      preferred_element_type=jnp.float32)            # (rows, f_out) f32
    else:
        # Re-associate: (x*gwr) @ weight first so the big matmul sees f_out lanes.
        h = jnp.dot(gwr_support, w_ref[...],
                    preferred_element_type=jnp.float32)              # (K_pad, f_out) f32
        out = jnp.dot(adj_ref[...], h.astype(jnp.bfloat16),
                      preferred_element_type=jnp.float32)            # (rows, f_out) f32

    out = out + b_ref[...]                                           # broadcast (1, f_out)
    o_ref[...] = jnp.maximum(out, 0.0).astype(o_ref.dtype)


@partial(jax.jit, static_argnames=("num_row_blocks",))
def _gw_graph_conv_impl(x, adj, gwr_weight, weight, bias, num_row_blocks):
    n, f_in = x.shape
    f_out = weight.shape[1]

    # Pad adj rows so they split evenly into sublane-aligned blocks, and adj cols
    # (== gwr_support rows) to a full lane multiple.  Zero padding is exact:
    # padded gwr_support rows are zero, and padded adj rows only produce output
    # rows that are sliced off below.
    n_row_pad = _round_up(n, _SUBLANE * num_row_blocks)
    k_pad = _round_up(n, _LANE)
    row_block = n_row_pad // num_row_blocks

    adj_p = jnp.pad(adj.astype(jnp.bfloat16), ((0, n_row_pad - n), (0, k_pad - n)))
    x_p = jnp.pad(x.astype(jnp.float32), ((0, k_pad - n), (0, 0)))
    gwr_p = jnp.pad(gwr_weight.astype(jnp.float32), ((0, k_pad - n), (0, 0)))
    w = weight.astype(jnp.float32)
    bias2d = bias.reshape(1, f_out).astype(jnp.float32)

    cost = pl.CostEstimate(
        flops=2 * n * n * min(f_in, f_out) + 2 * n * f_in * f_out,
        transcendentals=0,
        bytes_accessed=(n_row_pad * k_pad * 2                 # bf16 adj (dominant)
                        + 2 * k_pad * f_in * 4                # x, gwr_weight
                        + f_in * f_out * 4 + f_out * 4        # weight, bias
                        + n_row_pad * f_out * 4),             # output
    )

    out_p = pl.pallas_call(
        gw_graph_conv_kernel,
        out_shape=jax.ShapeDtypeStruct((n_row_pad, f_out), jnp.float32),
        grid=(num_row_blocks,),
        in_specs=[
            pl.BlockSpec((k_pad, f_in), lambda i: (0, 0)),        # x (full)
            pl.BlockSpec((k_pad, f_in), lambda i: (0, 0)),        # gwr_weight (full)
            pl.BlockSpec((row_block, k_pad), lambda i: (i, 0)),   # adj row-block
            pl.BlockSpec((f_in, f_out), lambda i: (0, 0)),        # weight (full)
            pl.BlockSpec((1, f_out), lambda i: (0, 0)),           # bias (full)
        ],
        out_specs=pl.BlockSpec((row_block, f_out), lambda i: (i, 0)),
        compiler_params=pltpu.CompilerParams(
            dimension_semantics=("parallel",)),
        cost_estimate=cost,
    )(x_p, gwr_p, adj_p, w, bias2d)

    return out_p[:n]


def gw_graph_convolution(x, adj, gwr_weight, weight, bias, *, num_row_blocks=None):
    """x: (N, f_in), adj: (N, N), gwr_weight: (N, f_in), weight: (f_in, f_out),
    bias: (f_out,). Returns (N, f_out) float32 = relu(adj @ (x * gwr_weight) @ weight + bias)."""
    n, f_in = x.shape
    assert adj.shape == (n, n)
    assert gwr_weight.shape == (n, f_in)
    assert weight.shape[0] == f_in
    if num_row_blocks is None:
        num_row_blocks = _default_num_row_blocks()
    return _gw_graph_conv_impl(x, adj, gwr_weight, weight, bias, num_row_blocks)


def gw_graph_convolution_ref(x, adj, gwr_weight, weight, bias):
    gwr_support = x * gwr_weight
    support = adj @ gwr_support
    out = support @ weight + bias[None, :]
    return jnp.maximum(out, 0.0)


if __name__ == "__main__":
    f_in, f_out = 4, 8
    key = jax.random.PRNGKey(0)
    kx, kadj = jax.random.split(key)

    # Deterministic inputs.
    x = jax.random.normal(kx, (N_NODES, f_in), dtype=jnp.float32)
    adj_raw = jax.random.uniform(kadj, (N_NODES, N_NODES), dtype=jnp.float32)
    adj = adj_raw / jnp.sum(adj_raw, axis=1, keepdims=True)  # row-normalized adjacency

    # Parameters, matching nn.init.constant_ in initialize_weights():
    gwr_weight = jnp.ones((N_NODES, f_in), dtype=jnp.float32)   # constant_(gwr_weight, 1)
    weight = jnp.ones((f_in, f_out), dtype=jnp.float32)         # constant_(weight, 1)
    bias = jnp.zeros((f_out,), dtype=jnp.float32)               # constant_(bias, 0)

    out = gw_graph_convolution(x, adj, gwr_weight, weight, bias)
    out = jax.block_until_ready(out)

    ref = gw_graph_convolution_ref(x, adj, gwr_weight, weight, bias)
    assert out.shape == (N_NODES, f_out)
    # Tolerance reflects bf16 big-matmul operands (accumulation is still f32).
    assert jnp.allclose(out, ref, atol=1e-2, rtol=1e-2), "mismatch vs reference"

    print("KERNEL_OK")
</pallas_src>

<mosaic_0001>
module attributes {stable_mosaic.version = 11 : i64} {
  func.func @gw_graph_conv_kernel(%arg0: i32, %arg1: memref<640x4xf32, #tpu.memory_space<vmem>>, %arg2: memref<640x4xf32, #tpu.memory_space<vmem>>, %arg3: memref<520x640xbf16, #tpu.memory_space<vmem>>, %arg4: memref<4x8xf32, #tpu.memory_space<vmem>>, %arg5: memref<1x8xf32, #tpu.memory_space<vmem>>, %arg6: memref<520x8xf32, #tpu.memory_space<vmem>>) attributes {dimension_semantics = [#tpu.dimension_semantics<parallel>], iteration_bounds = array<i64: 1>, scalar_prefetch = 0 : i64, scratch_operands = 0 : i64, tpu.core_type = #tpu.core_type<tc>, window_params = [{pipeline_mode = #tpu.pipeline_mode<synchronous>, transform_indices = @transform_0, window_bounds = array<i64: 640, 4>}, {pipeline_mode = #tpu.pipeline_mode<synchronous>, transform_indices = @transform_1, window_bounds = array<i64: 640, 4>}, {transform_indices = @transform_2, window_bounds = array<i64: 520, 640>}, {pipeline_mode = #tpu.pipeline_mode<synchronous>, transform_indices = @transform_3, window_bounds = array<i64: 4, 8>}, {pipeline_mode = #tpu.pipeline_mode<synchronous>, transform_indices = @transform_4, window_bounds = array<i64: 1, 8>}, {transform_indices = @transform_5, window_bounds = array<i64: 520, 8>}]} {
    %c0 = arith.constant 0 : index
    %c0_0 = arith.constant 0 : index
    %0 = vector.load %arg1[%c0, %c0_0] : memref<640x4xf32, #tpu.memory_space<vmem>>, vector<640x4xf32>
    %c0_1 = arith.constant 0 : index
    %c0_2 = arith.constant 0 : index
    %1 = vector.load %arg2[%c0_1, %c0_2] : memref<640x4xf32, #tpu.memory_space<vmem>>, vector<640x4xf32>
    %2 = arith.mulf %0, %1 : vector<640x4xf32>
    %c0_3 = arith.constant 0 : index
    %c0_4 = arith.constant 0 : index
    %3 = vector.load %arg3[%c0_3, %c0_4] : memref<520x640xbf16, #tpu.memory_space<vmem>>, vector<520x640xbf16>
    %4 = arith.truncf %2 : vector<640x4xf32> to vector<640x4xbf16>
    %cst = arith.constant dense<0.000000e+00> : vector<520x4xf32>
    %5 = tpu.matmul %3, %4, %cst {dimension_numbers = #tpu.dot_dimension_numbers<[1], [0], [0], [1], [0, 0, 1, 1], [], []>} : vector<520x640xbf16>, vector<640x4xbf16>, vector<520x4xf32> -> vector<520x4xf32>
    %c0_5 = arith.constant 0 : index
    %c0_6 = arith.constant 0 : index
    %6 = vector.load %arg4[%c0_5, %c0_6] : memref<4x8xf32, #tpu.memory_space<vmem>>, vector<4x8xf32>
    %cst_7 = arith.constant dense<0.000000e+00> : vector<520x8xf32>
    %7 = tpu.matmul %5, %6, %cst_7 {dimension_numbers = #tpu.dot_dimension_numbers<[1], [0], [0], [1], [0, 0, 1, 1], [], []>} : vector<520x4xf32>, vector<4x8xf32>, vector<520x8xf32> -> vector<520x8xf32>
    %c0_8 = arith.constant 0 : index
    %c0_9 = arith.constant 0 : index
    %8 = vector.load %arg5[%c0_8, %c0_9] : memref<1x8xf32, #tpu.memory_space<vmem>>, vector<1x8xf32>
    %9 = vector.broadcast %8 : vector<1x8xf32> to vector<520x8xf32>
    %10 = arith.addf %7, %9 : vector<520x8xf32>
    %cst_10 = arith.constant 0.000000e+00 : f32
    %11 = vector.broadcast %cst_10 : f32 to vector<520x8xf32>
    %12 = arith.maximumf %10, %11 : vector<520x8xf32>
    %c0_11 = arith.constant 0 : index
    %c0_12 = arith.constant 0 : index
    %13 = vector.load %arg6[%c0_11, %c0_12] : memref<520x8xf32, #tpu.memory_space<vmem>>, vector<520x8xf32>
    tpu.vector_store %arg6[%c0_11, %c0_12], %12 {strides = array<i32>} : memref<520x8xf32, #tpu.memory_space<vmem>>, vector<520x8xf32>,
    return
  }
  func.func @transform_0(%arg0: i32) -> (i32, i32) {
    %c0_i32 = arith.constant 0 : i32
    %c0_i32_0 = arith.constant 0 : i32
    %c0_i32_1 = arith.constant 0 : i32
    return %c0_i32, %c0_i32_0 : i32, i32
  }
  func.func @transform_1(%arg0: i32) -> (i32, i32) {
    %c0_i32 = arith.constant 0 : i32
    %c0_i32_0 = arith.constant 0 : i32
    %c0_i32_1 = arith.constant 0 : i32
    return %c0_i32, %c0_i32_0 : i32, i32
  }
  func.func @transform_2(%arg0: i32) -> (i32, i32) {
    %c0_i32 = arith.constant 0 : i32
    %c0_i32_0 = arith.constant 0 : i32
    return %arg0, %c0_i32 : i32, i32
  }
  func.func @transform_3(%arg0: i32) -> (i32, i32) {
    %c0_i32 = arith.constant 0 : i32
    %c0_i32_0 = arith.constant 0 : i32
    %c0_i32_1 = arith.constant 0 : i32
    return %c0_i32, %c0_i32_0 : i32, i32
  }
  func.func @transform_4(%arg0: i32) -> (i32, i32) {
    %c0_i32 = arith.constant 0 : i32
    %c0_i32_0 = arith.constant 0 : i32
    %c0_i32_1 = arith.constant 0 : i32
    return %c0_i32, %c0_i32_0 : i32, i32
  }
  func.func @transform_5(%arg0: i32) -> (i32, i32) {
    %c0_i32 = arith.constant 0 : i32
    %c0_i32_0 = arith.constant 0 : i32
    return %arg0, %c0_i32 : i32, i32
  }
}

</mosaic_0001>

<llo_original>
// kernel: _gw_graph_conv_impl.1
$region0: #{_gw_graph_conv_impl.1}
  #allocation0 [shape = 'u32[]', space=smem, size = 0x4, offset = 0x4, fixed_abs, tag = 'smem constant byte address 0x4 - core index']
  #allocation1 [shape = 'u32[72,128]{1,0:T(1,128)}', space=vmem, size = 0x9000, scoped, tag = 'internal scratch']
  %s0 = inlined_call_operand.vmem [shape: f32[640,4], index: 0, kind: input, shape index: {}]
  %s1 = inlined_call_operand.vmem [shape: f32[640,4], index: 1, kind: input, shape index: {}]
  %s2 = inlined_call_operand.vmem [shape: bf16[520,640], index: 2, kind: input, shape index: {}]
  %s3 = inlined_call_operand.vmem [shape: f32[4,8], index: 3, kind: input, shape index: {}]
  %s4 = inlined_call_operand.vmem [shape: f32[1,8], index: 4, kind: input, shape index: {}]
  %s5 = inlined_call_operand.vmem [shape: f32[520,8], index: 5, kind: output, shape index: {}]
  %s6 = sld [smem:[#allocation0]]
  $region30: #{_gw_graph_conv_impl.1} parent=0
    _
  %s8 = ssub.s32 1, %s6
  %s9 = scalar_select 0, %s8, %s6
  // Predicated region
  $region2: #{_gw_graph_conv_impl.1} parent=0 // pred_check
    _
  $region3: #{_gw_graph_conv_impl.1} parent=0 // pred_check_branch
    %11 = sbr.rel (0) target = $region5
  $region4: #{_gw_graph_conv_impl.1} parent=0 // pred_region
    _
  $region5: #{_gw_graph_conv_impl.1} parent=0 // pred_fallthru
    _
  // Predicated region
  $region6: #{_gw_graph_conv_impl.1} parent=0 // pred_check
    _
  $region7: #{_gw_graph_conv_impl.1} parent=0 // pred_check_branch
    %13 = sbr.rel (0) target = $region9
  $region8: #{_gw_graph_conv_impl.1} parent=0 // pred_region
    _
  $region9: #{_gw_graph_conv_impl.1} parent=0 // pred_fallthru
    _
  // Predicated region
  $region10: #{_gw_graph_conv_impl.1} parent=0 // pred_check
    _
  $region11: #{_gw_graph_conv_impl.1} parent=0 // pred_check_branch
    %15 = sbr.rel (0) target = $region13
  $region12: #{_gw_graph_conv_impl.1} parent=0 // pred_region
    _
  $region13: #{_gw_graph_conv_impl.1} parent=0 // pred_fallthru
    _
  // Predicated region
  $region14: #{_gw_graph_conv_impl.1} parent=0 // pred_check
    _
  $region15: #{_gw_graph_conv_impl.1} parent=0 // pred_check_branch
    %17 = sbr.rel (0) target = $region17
  $region16: #{_gw_graph_conv_impl.1} parent=0 // pred_region
    _
  $region17: #{_gw_graph_conv_impl.1} parent=0 // pred_fallthru
    _
  // Predicated region
  $region18: #{_gw_graph_conv_impl.1} parent=0 // pred_check
    _
  $region19: #{_gw_graph_conv_impl.1} parent=0 // pred_check_branch
    %19 = sbr.rel (0) target = $region21
  $region20: #{_gw_graph_conv_impl.1} parent=0 // pred_region
    _
  $region21: #{_gw_graph_conv_impl.1} parent=0 // pred_fallthru
    _
  %v20 = vld [vmem:[%s0] sm:$0xff]
  %v21 = vld [vmem:[%s0 + $0x8] sm:$0xff]
  %v22 = vld [vmem:[%s0 + $0x10] sm:$0xff]
  %v23 = vld [vmem:[%s0 + $0x18] sm:$0xff]
  %v24 = vld [vmem:[%s0 + $0x20] sm:$0xff]
  %v25 = vld [vmem:[%s0 + $0x28] sm:$0xff]
  %v26 = vld [vmem:[%s0 + $0x30] sm:$0xff]
  %v27 = vld [vmem:[%s0 + $0x38] sm:$0xff]
  %v28 = vld [vmem:[%s0 + $0x40] sm:$0xff]
  %v29 = vld [vmem:[%s0 + $0x48] sm:$0xff]
  %v30 = vld [vmem:[%s0 + $0x50] sm:$0xff]
  %v31 = vld [vmem:[%s0 + $0x58] sm:$0xff]
  %v32 = vld [vmem:[%s0 + $0x60] sm:$0xff]
  %v33 = vld [vmem:[%s0 + $0x68] sm:$0xff]
  %v34 = vld [vmem:[%s0 + $0x70] sm:$0xff]
  %v35 = vld [vmem:[%s0 + $0x78] sm:$0xff]
  %v36 = vld [vmem:[%s0 + $0x80] sm:$0xff]
  %v37 = vld [vmem:[%s0 + $0x88] sm:$0xff]
  %v38 = vld [vmem:[%s0 + $0x90] sm:$0xff]
  %v39 = vld [vmem:[%s0 + $0x98] sm:$0xff]
  %v40 = vld [vmem:[%s0 + $0xa0] sm:$0xff]
  %v41 = vld [vmem:[%s0 + $0xa8] sm:$0xff]
  %v42 = vld [vmem:[%s0 + $0xb0] sm:$0xff]
  %v43 = vld [vmem:[%s0 + $0xb8] sm:$0xff]
  %v44 = vld [vmem:[%s0 + $0xc0] sm:$0xff]
  %v45 = vld [vmem:[%s0 + $0xc8] sm:$0xff]
  %v46 = vld [vmem:[%s0 + $0xd0] sm:$0xff]
  %v47 = vld [vmem:[%s0 + $0xd8] sm:$0xff]
  %v48 = vld [vmem:[%s0 + $0xe0] sm:$0xff]
  %v49 = vld [vmem:[%s0 + $0xe8] sm:$0xff]
  %v50 = vld [vmem:[%s0 + $0xf0] sm:$0xff]
  %v51 = vld [vmem:[%s0 + $0xf8] sm:$0xff]
  %v52 = vld [vmem:[%s0 + $0x100] sm:$0xff]
  %v53 = vld [vmem:[%s0 + $0x108] sm:$0xff]
  %v54 = vld [vmem:[%s0 + $0x110] sm:$0xff]
  %v55 = vld [vmem:[%s0 + $0x118] sm:$0xff]
  %v56 = vld [vmem:[%s0 + $0x120] sm:$0xff]
  %v57 = vld [vmem:[%s0 + $0x128] sm:$0xff]
  %v58 = vld [vmem:[%s0 + $0x130] sm:$0xff]
  %v59 = vld [vmem:[%s0 + $0x138] sm:$0xff]
  %v60 = vld [vmem:[%s0 + $0x140] sm:$0xff]
  %v61 = vld [vmem:[%s0 + $0x148] sm:$0xff]
  %v62 = vld [vmem:[%s0 + $0x150] sm:$0xff]
  %v63 = vld [vmem:[%s0 + $0x158] sm:$0xff]
  %v64 = vld [vmem:[%s0 + $0x160] sm:$0xff]
  %v65 = vld [vmem:[%s0 + $0x168] sm:$0xff]
  %v66 = vld [vmem:[%s0 + $0x170] sm:$0xff]
  %v67 = vld [vmem:[%s0 + $0x178] sm:$0xff]
  %v68 = vld [vmem:[%s0 + $0x180] sm:$0xff]
  %v69 = vld [vmem:[%s0 + $0x188] sm:$0xff]
  %v70 = vld [vmem:[%s0 + $0x190] sm:$0xff]
  %v71 = vld [vmem:[%s0 + $0x198] sm:$0xff]
  %v72 = vld [vmem:[%s0 + $0x1a0] sm:$0xff]
  %v73 = vld [vmem:[%s0 + $0x1a8] sm:$0xff]
  %v74 = vld [vmem:[%s0 + $0x1b0] sm:$0xff]
  %v75 = vld [vmem:[%s0 + $0x1b8] sm:$0xff]
  %v76 = vld [vmem:[%s0 + $0x1c0] sm:$0xff]
  %v77 = vld [vmem:[%s0 + $0x1c8] sm:$0xff]
  %v78 = vld [vmem:[%s0 + $0x1d0] sm:$0xff]
  %v79 = vld [vmem:[%s0 + $0x1d8] sm:$0xff]
  %v80 = vld [vmem:[%s0 + $0x1e0] sm:$0xff]
  %v81 = vld [vmem:[%s0 + $0x1e8] sm:$0xff]
  %v82 = vld [vmem:[%s0 + $0x1f0] sm:$0xff]
  %v83 = vld [vmem:[%s0 + $0x1f8] sm:$0xff]
  %v84 = vld [vmem:[%s0 + $0x200] sm:$0xff]
  %v85 = vld [vmem:[%s0 + $0x208] sm:$0xff]
  %v86 = vld [vmem:[%s0 + $0x210] sm:$0xff]
  %v87 = vld [vmem:[%s0 + $0x218] sm:$0xff]
  %v88 = vld [vmem:[%s0 + $0x220] sm:$0xff]
  %v89 = vld [vmem:[%s0 + $0x228] sm:$0xff]
  %v90 = vld [vmem:[%s0 + $0x230] sm:$0xff]
  %v91 = vld [vmem:[%s0 + $0x238] sm:$0xff]
  %v92 = vld [vmem:[%s0 + $0x240] sm:$0xff]
  %v93 = vld [vmem:[%s0 + $0x248] sm:$0xff]
  %v94 = vld [vmem:[%s0 + $0x250] sm:$0xff]
  %v95 = vld [vmem:[%s0 + $0x258] sm:$0xff]
  %v96 = vld [vmem:[%s0 + $0x260] sm:$0xff]
  %v97 = vld [vmem:[%s0 + $0x268] sm:$0xff]
  %v98 = vld [vmem:[%s0 + $0x270] sm:$0xff]
  %v99 = vld [vmem:[%s0 + $0x278] sm:$0xff]
  %v100 = vld [vmem:[%s1] sm:$0xff]
  %v101 = vld [vmem:[%s1 + $0x8] sm:$0xff]
  %v102 = vld [vmem:[%s1 + $0x10] sm:$0xff]
  %v103 = vld [vmem:[%s1 + $0x18] sm:$0xff]
  %v104 = vld [vmem:[%s1 + $0x20] sm:$0xff]
  %v105 = vld [vmem:[%s1 + $0x28] sm:$0xff]
  %v106 = vld [vmem:[%s1 + $0x30] sm:$0xff]
  %v107 = vld [vmem:[%s1 + $0x38] sm:$0xff]
  %v108 = vld [vmem:[%s1 + $0x40] sm:$0xff]
  %v109 = vld [vmem:[%s1 + $0x48] sm:$0xff]
  %v110 = vld [vmem:[%s1 + $0x50] sm:$0xff]
  %v111 = vld [vmem:[%s1 + $0x58] sm:$0xff]
  %v112 = vld [vmem:[%s1 + $0x60] sm:$0xff]
  %v113 = vld [vmem:[%s1 + $0x68] sm:$0xff]
  %v114 = vld [vmem:[%s1 + $0x70] sm:$0xff]
  %v115 = vld [vmem:[%s1 + $0x78] sm:$0xff]
  %v116 = vld [vmem:[%s1 + $0x80] sm:$0xff]
  %v117 = vld [vmem:[%s1 + $0x88] sm:$0xff]
  %v118 = vld [vmem:[%s1 + $0x90] sm:$0xff]
  %v119 = vld [vmem:[%s1 + $0x98] sm:$0xff]
  %v120 = vld [vmem:[%s1 + $0xa0] sm:$0xff]
  %v121 = vld [vmem:[%s1 + $0xa8] sm:$0xff]
  %v122 = vld [vmem:[%s1 + $0xb0] sm:$0xff]
  %v123 = vld [vmem:[%s1 + $0xb8] sm:$0xff]
  %v124 = vld [vmem:[%s1 + $0xc0] sm:$0xff]
  %v125 = vld [vmem:[%s1 + $0xc8] sm:$0xff]
  %v126 = vld [vmem:[%s1 + $0xd0] sm:$0xff]
  %v127 = vld [vmem:[%s1 + $0xd8] sm:$0xff]
  %v128 = vld [vmem:[%s1 + $0xe0] sm:$0xff]
  %v129 = vld [vmem:[%s1 + $0xe8] sm:$0xff]
  %v130 = vld [vmem:[%s1 + $0xf0] sm:$0xff]
  %v131 = vld [vmem:[%s1 + $0xf8] sm:$0xff]
  %v132 = vld [vmem:[%s1 + $0x100] sm:$0xff]
  %v133 = vld [vmem:[%s1 + $0x108] sm:$0xff]
  %v134 = vld [vmem:[%s1 + $0x110] sm:$0xff]
  %v135 = vld [vmem:[%s1 + $0x118] sm:$0xff]
  %v136 = vld [vmem:[%s1 + $0x120] sm:$0xff]
  %v137 = vld [vmem:[%s1 + $0x128] sm:$0xff]
  %v138 = vld [vmem:[%s1 + $0x130] sm:$0xff]
  %v139 = vld [vmem:[%s1 + $0x138] sm:$0xff]
  %v140 = vld [vmem:[%s1 + $0x140] sm:$0xff]
  %v141 = vld [vmem:[%s1 + $0x148] sm:$0xff]
  %v142 = vld [vmem:[%s1 + $0x150] sm:$0xff]
  %v143 = vld [vmem:[%s1 + $0x158] sm:$0xff]
  %v144 = vld [vmem:[%s1 + $0x160] sm:$0xff]
  %v145 = vld [vmem:[%s1 + $0x168] sm:$0xff]
  %v146 = vld [vmem:[%s1 + $0x170] sm:$0xff]
  %v147 = vld [vmem:[%s1 + $0x178] sm:$0xff]
  %v148 = vld [vmem:[%s1 + $0x180] sm:$0xff]
  %v149 = vld [vmem:[%s1 + $0x188] sm:$0xff]
  %v150 = vld [vmem:[%s1 + $0x190] sm:$0xff]
  %v151 = vld [vmem:[%s1 + $0x198] sm:$0xff]
  %v152 = vld [vmem:[%s1 + $0x1a0] sm:$0xff]
  %v153 = vld [vmem:[%s1 + $0x1a8] sm:$0xff]
  %v154 = vld [vmem:[%s1 + $0x1b0] sm:$0xff]
  %v155 = vld [vmem:[%s1 + $0x1b8] sm:$0xff]
  %v156 = vld [vmem:[%s1 + $0x1c0] sm:$0xff]
  %v157 = vld [vmem:[%s1 + $0x1c8] sm:$0xff]
  %v158 = vld [vmem:[%s1 + $0x1d0] sm:$0xff]
  %v159 = vld [vmem:[%s1 + $0x1d8] sm:$0xff]
  %v160 = vld [vmem:[%s1 + $0x1e0] sm:$0xff]
  %v161 = vld [vmem:[%s1 + $0x1e8] sm:$0xff]
  %v162 = vld [vmem:[%s1 + $0x1f0] sm:$0xff]
  %v163 = vld [vmem:[%s1 + $0x1f8] sm:$0xff]
  %v164 = vld [vmem:[%s1 + $0x200] sm:$0xff]
  %v165 = vld [vmem:[%s1 + $0x208] sm:$0xff]
  %v166 = vld [vmem:[%s1 + $0x210] sm:$0xff]
  %v167 = vld [vmem:[%s1 + $0x218] sm:$0xff]
  %v168 = vld [vmem:[%s1 + $0x220] sm:$0xff]
  %v169 = vld [vmem:[%s1 + $0x228] sm:$0xff]
  %v170 = vld [vmem:[%s1 + $0x230] sm:$0xff]
  %v171 = vld [vmem:[%s1 + $0x238] sm:$0xff]
  %v172 = vld [vmem:[%s1 + $0x240] sm:$0xff]
  %v173 = vld [vmem:[%s1 + $0x248] sm:$0xff]
  %v174 = vld [vmem:[%s1 + $0x250] sm:$0xff]
  %v175 = vld [vmem:[%s1 + $0x258] sm:$0xff]
  %v176 = vld [vmem:[%s1 + $0x260] sm:$0xff]
  %v177 = vld [vmem:[%s1 + $0x268] sm:$0xff]
  %v178 = vld [vmem:[%s1 + $0x270] sm:$0xff]
  %v179 = vld [vmem:[%s1 + $0x278] sm:$0xff]
  %v180 = vmul.f32 %v20, %v100
  %v181 = vmul.f32 %v21, %v101
  %v182 = vmul.f32 %v22, %v102
  %v183 = vmul.f32 %v23, %v103
  %v184 = vmul.f32 %v24, %v104
  %v185 = vmul.f32 %v25, %v105
  %v186 = vmul.f32 %v26, %v106
  %v187 = vmul.f32 %v27, %v107
  %v188 = vmul.f32 %v28, %v108
  %v189 = vmul.f32 %v29, %v109
  %v190 = vmul.f32 %v30, %v110
  %v191 = vmul.f32 %v31, %v111
  %v192 = vmul.f32 %v32, %v112
  %v193 = vmul.f32 %v33, %v113
  %v194 = vmul.f32 %v34, %v114
  %v195 = vmul.f32 %v35, %v115
  %v196 = vmul.f32 %v36, %v116
  %v197 = vmul.f32 %v37, %v117
  %v198 = vmul.f32 %v38, %v118
  %v199 = vmul.f32 %v39, %v119
  %v200 = vmul.f32 %v40, %v120
  %v201 = vmul.f32 %v41, %v121
  %v202 = vmul.f32 %v42, %v122
  %v203 = vmul.f32 %v43, %v123
  %v204 = vmul.f32 %v44, %v124
  %v205 = vmul.f32 %v45, %v125
  %v206 = vmul.f32 %v46, %v126
  %v207 = vmul.f32 %v47, %v127
  %v208 = vmul.f32 %v48, %v128
  %v209 = vmul.f32 %v49, %v129
  %v210 = vmul.f32 %v50, %v130
  %v211 = vmul.f32 %v51, %v131
  %v212 = vmul.f32 %v52, %v132
  %v213 = vmul.f32 %v53, %v133
  %v214 = vmul.f32 %v54, %v134
  %v215 = vmul.f32 %v55, %v135
  %v216 = vmul.f32 %v56, %v136
  %v217 = vmul.f32 %v57, %v137
  %v218 = vmul.f32 %v58, %v138
  %v219 = vmul.f32 %v59, %v139
  %v220 = vmul.f32 %v60, %v140
  %v221 = vmul.f32 %v61, %v141
  %v222 = vmul.f32 %v62, %v142
  %v223 = vmul.f32 %v63, %v143
  %v224 = vmul.f32 %v64, %v144
  %v225 = vmul.f32 %v65, %v145
  %v226 = vmul.f32 %v66, %v146
  %v227 = vmul.f32 %v67, %v147
  %v228 = vmul.f32 %v68, %v148
  %v229 = vmul.f32 %v69, %v149
  %v230 = vmul.f32 %v70, %v150
  %v231 = vmul.f32 %v71, %v151
  %v232 = vmul.f32 %v72, %v152
  %v233 = vmul.f32 %v73, %v153
  %v234 = vmul.f32 %v74, %v154
  %v235 = vmul.f32 %v75, %v155
  %v236 = vmul.f32 %v76, %v156
  %v237 = vmul.f32 %v77, %v157
  %v238 = vmul.f32 %v78, %v158
  %v239 = vmul.f32 %v79, %v159
  %v240 = vmul.f32 %v80, %v160
  %v241 = vmul.f32 %v81, %v161
  %v242 = vmul.f32 %v82, %v162
  %v243 = vmul.f32 %v83, %v163
  %v244 = vmul.f32 %v84, %v164
  %v245 = vmul.f32 %v85, %v165
  %v246 = vmul.f32 %v86, %v166
  %v247 = vmul.f32 %v87, %v167
  %v248 = vmul.f32 %v88, %v168
  %v249 = vmul.f32 %v89, %v169
  %v250 = vmul.f32 %v90, %v170
  %v251 = vmul.f32 %v91, %v171
  %v252 = vmul.f32 %v92, %v172
  %v253 = vmul.f32 %v93, %v173
  %v254 = vmul.f32 %v94, %v174
  %v255 = vmul.f32 %v95, %v175
  %v256 = vmul.f32 %v96, %v176
  %v257 = vmul.f32 %v97, %v177
  %v258 = vmul.f32 %v98, %v178
  %v259 = vmul.f32 %v99, %v179
  %v260 = vld [vmem:[%s2] sm:$0xff]
  %v261 = vld [vmem:[%s2 + $0x8] sm:$0xff]
  %v262 = vld [vmem:[%s2 + $0x10] sm:$0xf]
  %v263 = vld [vmem:[%s2 + $0x14] sm:$0xff]
  %v264 = vld [vmem:[%s2 + $0x1c] sm:$0xff]
  %v265 = vld [vmem:[%s2 + $0x24] sm:$0xf]
  %v266 = vld [vmem:[%s2 + $0x28] sm:$0xff]
  %v267 = vld [vmem:[%s2 + $0x30] sm:$0xff]
  %v268 = vld [vmem:[%s2 + $0x38] sm:$0xf]
  %v269 = vld [vmem:[%s2 + $0x3c] sm:$0xff]
  %v270 = vld [vmem:[%s2 + $0x44] sm:$0xff]
  %v271 = vld [vmem:[%s2 + $0x4c] sm:$0xf]
  %v272 = vld [vmem:[%s2 + $0x50] sm:$0xff]
  %v273 = vld [vmem:[%s2 + $0x58] sm:$0xff]
  %v274 = vld [vmem:[%s2 + $0x60] sm:$0xf]
  %v275 = vld [vmem:[%s2 + $0x64] sm:$0xff]
  %v276 = vld [vmem:[%s2 + $0x6c] sm:$0xff]
  %v277 = vld [vmem:[%s2 + $0x74] sm:$0xf]
  %v278 = vld [vmem:[%s2 + $0x78] sm:$0xff]
  %v279 = vld [vmem:[%s2 + $0x80] sm:$0xff]
  %v280 = vld [vmem:[%s2 + $0x88] sm:$0xf]
  %v281 = vld [vmem:[%s2 + $0x8c] sm:$0xff]
  %v282 = vld [vmem:[%s2 + $0x94] sm:$0xff]
  %v283 = vld [vmem:[%s2 + $0x9c] sm:$0xf]
  %v284 = vld [vmem:[%s2 + $0xa0] sm:$0xff]
  %v285 = vld [vmem:[%s2 + $0xa8] sm:$0xff]
  %v286 = vld [vmem:[%s2 + $0xb0] sm:$0xf]
  %v287 = vld [vmem:[%s2 + $0xb4] sm:$0xff]
  %v288 = vld [vmem:[%s2 + $0xbc] sm:$0xff]
  %v289 = vld [vmem:[%s2 + $0xc4] sm:$0xf]
  %v290 = vld [vmem:[%s2 + $0xc8] sm:$0xff]
  %v291 = vld [vmem:[%s2 + $0xd0] sm:$0xff]
  %v292 = vld [vmem:[%s2 + $0xd8] sm:$0xf]
  %v293 = vld [vmem:[%s2 + $0xdc] sm:$0xff]
  %v294 = vld [vmem:[%s2 + $0xe4] sm:$0xff]
  %v295 = vld [vmem:[%s2 + $0xec] sm:$0xf]
  %v296 = vld [vmem:[%s2 + $0xf0] sm:$0xff]
  %v297 = vld [vmem:[%s2 + $0xf8] sm:$0xff]
  %v298 = vld [vmem:[%s2 + $0x100] sm:$0xf]
  %v299 = vld [vmem:[%s2 + $0x104] sm:$0xff]
  %v300 = vld [vmem:[%s2 + $0x10c] sm:$0xff]
  %v301 = vld [vmem:[%s2 + $0x114] sm:$0xf]
  %v302 = vld [vmem:[%s2 + $0x118] sm:$0xff]
  %v303 = vld [vmem:[%s2 + $0x120] sm:$0xff]
  %v304 = vld [vmem:[%s2 + $0x128] sm:$0xf]
  %v305 = vld [vmem:[%s2 + $0x12c] sm:$0xff]
  %v306 = vld [vmem:[%s2 + $0x134] sm:$0xff]
  %v307 = vld [vmem:[%s2 + $0x13c] sm:$0xf]
  %v308 = vld [vmem:[%s2 + $0x140] sm:$0xff]
  %v309 = vld [vmem:[%s2 + $0x148] sm:$0xff]
  %v310 = vld [vmem:[%s2 + $0x150] sm:$0xf]
  %v311 = vld [vmem:[%s2 + $0x154] sm:$0xff]
  %v312 = vld [vmem:[%s2 + $0x15c] sm:$0xff]
  %v313 = vld [vmem:[%s2 + $0x164] sm:$0xf]
  %v314 = vld [vmem:[%s2 + $0x168] sm:$0xff]
  %v315 = vld [vmem:[%s2 + $0x170] sm:$0xff]
  %v316 = vld [vmem:[%s2 + $0x178] sm:$0xf]
  %v317 = vld [vmem:[%s2 + $0x17c] sm:$0xff]
  %v318 = vld [vmem:[%s2 + $0x184] sm:$0xff]
  %v319 = vld [vmem:[%s2 + $0x18c] sm:$0xf]
  %v320 = vld [vmem:[%s2 + $0x190] sm:$0xff]
  %v321 = vld [vmem:[%s2 + $0x198] sm:$0xff]
  %v322 = vld [vmem:[%s2 + $0x1a0] sm:$0xf]
  %v323 = vld [vmem:[%s2 + $0x1a4] sm:$0xff]
  %v324 = vld [vmem:[%s2 + $0x1ac] sm:$0xff]
  %v325 = vld [vmem:[%s2 + $0x1b4] sm:$0xf]
  %v326 = vld [vmem:[%s2 + $0x1b8] sm:$0xff]
  %v327 = vld [vmem:[%s2 + $0x1c0] sm:$0xff]
  %v328 = vld [vmem:[%s2 + $0x1c8] sm:$0xf]
  %v329 = vld [vmem:[%s2 + $0x1cc] sm:$0xff]
  %v330 = vld [vmem:[%s2 + $0x1d4] sm:$0xff]
  %v331 = vld [vmem:[%s2 + $0x1dc] sm:$0xf]
  %v332 = vld [vmem:[%s2 + $0x1e0] sm:$0xff]
  %v333 = vld [vmem:[%s2 + $0x1e8] sm:$0xff]
  %v334 = vld [vmem:[%s2 + $0x1f0] sm:$0xf]
  %v335 = vld [vmem:[%s2 + $0x1f4] sm:$0xff]
  %v336 = vld [vmem:[%s2 + $0x1fc] sm:$0xff]
  %v337 = vld [vmem:[%s2 + $0x204] sm:$0xf]
  %v338 = vld [vmem:[%s2 + $0x208] sm:$0xff]
  %v339 = vld [vmem:[%s2 + $0x210] sm:$0xff]
  %v340 = vld [vmem:[%s2 + $0x218] sm:$0xf]
  %v341 = vld [vmem:[%s2 + $0x21c] sm:$0xff]
  %v342 = vld [vmem:[%s2 + $0x224] sm:$0xff]
  %v343 = vld [vmem:[%s2 + $0x22c] sm:$0xf]
  %v344 = vld [vmem:[%s2 + $0x230] sm:$0xff]
  %v345 = vld [vmem:[%s2 + $0x238] sm:$0xff]
  %v346 = vld [vmem:[%s2 + $0x240] sm:$0xf]
  %v347 = vld [vmem:[%s2 + $0x244] sm:$0xff]
  %v348 = vld [vmem:[%s2 + $0x24c] sm:$0xff]
  %v349 = vld [vmem:[%s2 + $0x254] sm:$0xf]
  %v350 = vld [vmem:[%s2 + $0x258] sm:$0xff]
  %v351 = vld [vmem:[%s2 + $0x260] sm:$0xff]
  %v352 = vld [vmem:[%s2 + $0x268] sm:$0xf]
  %v353 = vld [vmem:[%s2 + $0x26c] sm:$0xff]
  %v354 = vld [vmem:[%s2 + $0x274] sm:$0xff]
  %v355 = vld [vmem:[%s2 + $0x27c] sm:$0xf]
  %v356 = vld [vmem:[%s2 + $0x280] sm:$0xff]
  %v357 = vld [vmem:[%s2 + $0x288] sm:$0xff]
  %v358 = vld [vmem:[%s2 + $0x290] sm:$0xf]
  %v359 = vld [vmem:[%s2 + $0x294] sm:$0xff]
  %v360 = vld [vmem:[%s2 + $0x29c] sm:$0xff]
  %v361 = vld [vmem:[%s2 + $0x2a4] sm:$0xf]
  %v362 = vld [vmem:[%s2 + $0x2a8] sm:$0xff]
  %v363 = vld [vmem:[%s2 + $0x2b0] sm:$0xff]
  %v364 = vld [vmem:[%s2 + $0x2b8] sm:$0xf]
  %v365 = vld [vmem:[%s2 + $0x2bc] sm:$0xff]
  %v366 = vld [vmem:[%s2 + $0x2c4] sm:$0xff]
  %v367 = vld [vmem:[%s2 + $0x2cc] sm:$0xf]
  %v368 = vld [vmem:[%s2 + $0x2d0] sm:$0xff]
  %v369 = vld [vmem:[%s2 + $0x2d8] sm:$0xff]
  %v370 = vld [vmem:[%s2 + $0x2e0] sm:$0xf]
  %v371 = vld [vmem:[%s2 + $0x2e4] sm:$0xff]
  %v372 = vld [vmem:[%s2 + $0x2ec] sm:$0xff]
  %v373 = vld [vmem:[%s2 + $0x2f4] sm:$0xf]
  %v374 = vld [vmem:[%s2 + $0x2f8] sm:$0xff]
  %v375 = vld [vmem:[%s2 + $0x300] sm:$0xff]
  %v376 = vld [vmem:[%s2 + $0x308] sm:$0xf]
  %v377 = vld [vmem:[%s2 + $0x30c] sm:$0xff]
  %v378 = vld [vmem:[%s2 + $0x314] sm:$0xff]
  %v379 = vld [vmem:[%s2 + $0x31c] sm:$0xf]
  %v380 = vld [vmem:[%s2 + $0x320] sm:$0xff]
  %v381 = vld [vmem:[%s2 + $0x328] sm:$0xff]
  %v382 = vld [vmem:[%s2 + $0x330] sm:$0xf]
  %v383 = vld [vmem:[%s2 + $0x334] sm:$0xff]
  %v384 = vld [vmem:[%s2 + $0x33c] sm:$0xff]
  %v385 = vld [vmem:[%s2 + $0x344] sm:$0xf]
  %v386 = vld [vmem:[%s2 + $0x348] sm:$0xff]
  %v387 = vld [vmem:[%s2 + $0x350] sm:$0xff]
  %v388 = vld [vmem:[%s2 + $0x358] sm:$0xf]
  %v389 = vld [vmem:[%s2 + $0x35c] sm:$0xff]
  %v390 = vld [vmem:[%s2 + $0x364] sm:$0xff]
  %v391 = vld [vmem:[%s2 + $0x36c] sm:$0xf]
  %v392 = vld [vmem:[%s2 + $0x370] sm:$0xff]
  %v393 = vld [vmem:[%s2 + $0x378] sm:$0xff]
  %v394 = vld [vmem:[%s2 + $0x380] sm:$0xf]
  %v395 = vld [vmem:[%s2 + $0x384] sm:$0xff]
  %v396 = vld [vmem:[%s2 + $0x38c] sm:$0xff]
  %v397 = vld [vmem:[%s2 + $0x394] sm:$0xf]
  %v398 = vld [vmem:[%s2 + $0x398] sm:$0xff]
  %v399 = vld [vmem:[%s2 + $0x3a0] sm:$0xff]
  %v400 = vld [vmem:[%s2 + $0x3a8] sm:$0xf]
  %v401 = vld [vmem:[%s2 + $0x3ac] sm:$0xff]
  %v402 = vld [vmem:[%s2 + $0x3b4] sm:$0xff]
  %v403 = vld [vmem:[%s2 + $0x3bc] sm:$0xf]
  %v404 = vld [vmem:[%s2 + $0x3c0] sm:$0xff]
  %v405 = vld [vmem:[%s2 + $0x3c8] sm:$0xff]
  %v406 = vld [vmem:[%s2 + $0x3d0] sm:$0xf]
  %v407 = vld [vmem:[%s2 + $0x3d4] sm:$0xff]
  %v408 = vld [vmem:[%s2 + $0x3dc] sm:$0xff]
  %v409 = vld [vmem:[%s2 + $0x3e4] sm:$0xf]
  %v410 = vld [vmem:[%s2 + $0x3e8] sm:$0xff]
  %v411 = vld [vmem:[%s2 + $0x3f0] sm:$0xff]
  %v412 = vld [vmem:[%s2 + $0x3f8] sm:$0xf]
  %v413 = vld [vmem:[%s2 + $0x3fc] sm:$0xff]
  %v414 = vld [vmem:[%s2 + $0x404] sm:$0xff]
  %v415 = vld [vmem:[%s2 + $0x40c] sm:$0xf]
  %v416 = vld [vmem:[%s2 + $0x410] sm:$0xff]
  %v417 = vld [vmem:[%s2 + $0x418] sm:$0xff]
  %v418 = vld [vmem:[%s2 + $0x420] sm:$0xf]
  %v419 = vld [vmem:[%s2 + $0x424] sm:$0xff]
  %v420 = vld [vmem:[%s2 + $0x42c] sm:$0xff]
  %v421 = vld [vmem:[%s2 + $0x434] sm:$0xf]
  %v422 = vld [vmem:[%s2 + $0x438] sm:$0xff]
  %v423 = vld [vmem:[%s2 + $0x440] sm:$0xff]
  %v424 = vld [vmem:[%s2 + $0x448] sm:$0xf]
  %v425 = vld [vmem:[%s2 + $0x44c] sm:$0xff]
  %v426 = vld [vmem:[%s2 + $0x454] sm:$0xff]
  %v427 = vld [vmem:[%s2 + $0x45c] sm:$0xf]
  %v428 = vld [vmem:[%s2 + $0x460] sm:$0xff]
  %v429 = vld [vmem:[%s2 + $0x468] sm:$0xff]
  %v430 = vld [vmem:[%s2 + $0x470] sm:$0xf]
  %v431 = vld [vmem:[%s2 + $0x474] sm:$0xff]
  %v432 = vld [vmem:[%s2 + $0x47c] sm:$0xff]
  %v433 = vld [vmem:[%s2 + $0x484] sm:$0xf]
  %v434 = vld [vmem:[%s2 + $0x488] sm:$0xff]
  %v435 = vld [vmem:[%s2 + $0x490] sm:$0xff]
  %v436 = vld [vmem:[%s2 + $0x498] sm:$0xf]
  %v437 = vld [vmem:[%s2 + $0x49c] sm:$0xff]
  %v438 = vld [vmem:[%s2 + $0x4a4] sm:$0xff]
  %v439 = vld [vmem:[%s2 + $0x4ac] sm:$0xf]
  %v440 = vld [vmem:[%s2 + $0x4b0] sm:$0xff]
  %v441 = vld [vmem:[%s2 + $0x4b8] sm:$0xff]
  %v442 = vld [vmem:[%s2 + $0x4c0] sm:$0xf]
  %v443 = vld [vmem:[%s2 + $0x4c4] sm:$0xff]
  %v444 = vld [vmem:[%s2 + $0x4cc] sm:$0xff]
  %v445 = vld [vmem:[%s2 + $0x4d4] sm:$0xf]
  %v446 = vld [vmem:[%s2 + $0x4d8] sm:$0xff]
  %v447 = vld [vmem:[%s2 + $0x4e0] sm:$0xff]
  %v448 = vld [vmem:[%s2 + $0x4e8] sm:$0xf]
  %v449 = vld [vmem:[%s2 + $0x4ec] sm:$0xff]
  %v450 = vld [vmem:[%s2 + $0x4f4] sm:$0xff]
  %v451 = vld [vmem:[%s2 + $0x4fc] sm:$0xf]
  %v452 = vld [vmem:[%s2 + $0x500] sm:$0xff]
  %v453 = vld [vmem:[%s2 + $0x508] sm:$0xff]
  %v454 = vld [vmem:[%s2 + $0x510] sm:$0xf]
  %v455 = vpack.c.bf16 %v181, %v180
  %v456 = vpack.c.bf16 %v183, %v182
  %v457 = vpack.c.bf16 %v185, %v184
  %v458 = vpack.c.bf16 %v187, %v186
  %v459 = vpack.c.bf16 %v189, %v188
  %v460 = vpack.c.bf16 %v191, %v190
  %v461 = vpack.c.bf16 %v193, %v192
  %v462 = vpack.c.bf16 %v195, %v194
  %v463 = vpack.c.bf16 %v197, %v196
  %v464 = vpack.c.bf16 %v199, %v198
  %v465 = vpack.c.bf16 %v201, %v200
  %v466 = vpack.c.bf16 %v203, %v202
  %v467 = vpack.c.bf16 %v205, %v204
  %v468 = vpack.c.bf16 %v207, %v206
  %v469 = vpack.c.bf16 %v209, %v208
  %v470 = vpack.c.bf16 %v211, %v210
  %v471 = vpack.c.bf16 %v213, %v212
  %v472 = vpack.c.bf16 %v215, %v214
  %v473 = vpack.c.bf16 %v217, %v216
  %v474 = vpack.c.bf16 %v219, %v218
  %v475 = vpack.c.bf16 %v221, %v220
  %v476 = vpack.c.bf16 %v223, %v222
  %v477 = vpack.c.bf16 %v225, %v224
  %v478 = vpack.c.bf16 %v227, %v226
  %v479 = vpack.c.bf16 %v229, %v228
  %v480 = vpack.c.bf16 %v231, %v230
  %v481 = vpack.c.bf16 %v233, %v232
  %v482 = vpack.c.bf16 %v235, %v234
  %v483 = vpack.c.bf16 %v237, %v236
  %v484 = vpack.c.bf16 %v239, %v238
  %v485 = vpack.c.bf16 %v241, %v240
  %v486 = vpack.c.bf16 %v243, %v242
  %v487 = vpack.c.bf16 %v245, %v244
  %v488 = vpack.c.bf16 %v247, %v246
  %v489 = vpack.c.bf16 %v249, %v248
  %v490 = vpack.c.bf16 %v251, %v250
  %v491 = vpack.c.bf16 %v253, %v252
  %v492 = vpack.c.bf16 %v255, %v254
  %v493 = vpack.c.bf16 %v257, %v256
  %v494 = vpack.c.bf16 %v259, %v258
  %v690 = vunpack.c.l.b16 %v260
  %v691 = vunpack.c.h.b16 %v260
  %v692 = vunpack.c.l.b16 %v261
  %v693 = vunpack.c.h.b16 %v261
  %v694 = vunpack.c.l.b16 %v262
  %v695 = vunpack.c.l.b16 %v263
  %v696 = vunpack.c.h.b16 %v263
  %v697 = vunpack.c.l.b16 %v264
  %v698 = vunpack.c.h.b16 %v264
  %v699 = vunpack.c.l.b16 %v265
  %v700 = vunpack.c.l.b16 %v266
  %v701 = vunpack.c.h.b16 %v266
  %v702 = vunpack.c.l.b16 %v267
  %v703 = vunpack.c.h.b16 %v267
  %v704 = vunpack.c.l.b16 %v268
  %v705 = vunpack.c.l.b16 %v269
  %v706 = vunpack.c.h.b16 %v269
  %v707 = vunpack.c.l.b16 %v270
  %v708 = vunpack.c.h.b16 %v270
  %v709 = vunpack.c.l.b16 %v271
  %v710 = vunpack.c.l.b16 %v272
  %v711 = vunpack.c.h.b16 %v272
  %v712 = vunpack.c.l.b16 %v273
  %v713 = vunpack.c.h.b16 %v273
  %v714 = vunpack.c.l.b16 %v274
  %v715 = vunpack.c.l.b16 %v275
  %v716 = vunpack.c.h.b16 %v275
  %v717 = vunpack.c.l.b16 %v276
  %v718 = vunpack.c.h.b16 %v276
  %v719 = vunpack.c.l.b16 %v277
  %v720 = vunpack.c.l.b16 %v278
  %v721 = vunpack.c.h.b16 %v278
  %v722 = vunpack.c.l.b16 %v279
  %v723 = vunpack.c.h.b16 %v279
  %v724 = vunpack.c.l.b16 %v280
  %v725 = vunpack.c.l.b16 %v281
  %v726 = vunpack.c.h.b16 %v281
  %v727 = vunpack.c.l.b16 %v282
  %v728 = vunpack.c.h.b16 %v282
  %v729 = vunpack.c.l.b16 %v283
  %v730 = vunpack.c.l.b16 %v284
  %v731 = vunpack.c.h.b16 %v284
  %v732 = vunpack.c.l.b16 %v285
  %v733 = vunpack.c.h.b16 %v285
  %v734 = vunpack.c.l.b16 %v286
  %v735 = vunpack.c.l.b16 %v287
  %v736 = vunpack.c.h.b16 %v287
  %v737 = vunpack.c.l.b16 %v288
  %v738 = vunpack.c.h.b16 %v288
  %v739 = vunpack.c.l.b16 %v289
  %v740 = vunpack.c.l.b16 %v290
  %v741 = vunpack.c.h.b16 %v290
  %v742 = vunpack.c.l.b16 %v291
  %v743 = vunpack.c.h.b16 %v291
  %v744 = vunpack.c.l.b16 %v292
  %v745 = vunpack.c.l.b16 %v293
  %v746 = vunpack.c.h.b16 %v293
  %v747 = vunpack.c.l.b16 %v294
  %v748 = vunpack.c.h.b16 %v294
  %v749 = vunpack.c.l.b16 %v295
  %v750 = vunpack.c.l.b16 %v296
  %v751 = vunpack.c.h.b16 %v296
  %v752 = vunpack.c.l.b16 %v297
  %v753 = vunpack.c.h.b16 %v297
  %v754 = vunpack.c.l.b16 %v298
  %v755 = vunpack.c.l.b16 %v299
  %v756 = vunpack.c.h.b16 %v299
  %v757 = vunpack.c.l.b16 %v300
  %v758 = vunpack.c.h.b16 %v300
  %v759 = vunpack.c.l.b16 %v301
  %v760 = vunpack.c.l.b16 %v302
  %v761 = vunpack.c.h.b16 %v302
  %v762 = vunpack.c.l.b16 %v303
  %v763 = vunpack.c.h.b16 %v303
  %v764 = vunpack.c.l.b16 %v304
  %v765 = vunpack.c.l.b16 %v305
  %v766 = vunpack.c.h.b16 %v305
  %v767 = vunpack.c.l.b16 %v306
  %v768 = vunpack.c.h.b16 %v306
  %v769 = vunpack.c.l.b16 %v307
  %v770 = vunpack.c.l.b16 %v308
  %v771 = vunpack.c.h.b16 %v308
  %v772 = vunpack.c.l.b16 %v309
  %v773 = vunpack.c.h.b16 %v309
  %v774 = vunpack.c.l.b16 %v310
  %v775 = vunpack.c.l.b16 %v311
  %v776 = vunpack.c.h.b16 %v311
  %v777 = vunpack.c.l.b16 %v312
  %v778 = vunpack.c.h.b16 %v312
  %v779 = vunpack.c.l.b16 %v313
  %v780 = vunpack.c.l.b16 %v314
  %v781 = vunpack.c.h.b16 %v314
  %v782 = vunpack.c.l.b16 %v315
  %v783 = vunpack.c.h.b16 %v315
  %v784 = vunpack.c.l.b16 %v316
  %v785 = vunpack.c.l.b16 %v317
  %v786 = vunpack.c.h.b16 %v317
  %v787 = vunpack.c.l.b16 %v318
  %v788 = vunpack.c.h.b16 %v318
  %v789 = vunpack.c.l.b16 %v319
  %v790 = vunpack.c.l.b16 %v320
  %v791 = vunpack.c.h.b16 %v320
  %v792 = vunpack.c.l.b16 %v321
  %v793 = vunpack.c.h.b16 %v321
  %v794 = vunpack.c.l.b16 %v322
  %v795 = vunpack.c.l.b16 %v323
  %v796 = vunpack.c.h.b16 %v323
  %v797 = vunpack.c.l.b16 %v324
  %v798 = vunpack.c.h.b16 %v324
  %v799 = vunpack.c.l.b16 %v325
  %v800 = vunpack.c.l.b16 %v326
  %v801 = vunpack.c.h.b16 %v326
  %v802 = vunpack.c.l.b16 %v327
  %v803 = vunpack.c.h.b16 %v327
  %v804 = vunpack.c.l.b16 %v328
  %v805 = vunpack.c.l.b16 %v329
  %v806 = vunpack.c.h.b16 %v329
  %v807 = vunpack.c.l.b16 %v330
  %v808 = vunpack.c.h.b16 %v330
  %v809 = vunpack.c.l.b16 %v331
  %v810 = vunpack.c.l.b16 %v332
  %v811 = vunpack.c.h.b16 %v332
  %v812 = vunpack.c.l.b16 %v333
  %v813 = vunpack.c.h.b16 %v333
  %v814 = vunpack.c.l.b16 %v334
  %v815 = vunpack.c.l.b16 %v335
  %v816 = vunpack.c.h.b16 %v335
  %v817 = vunpack.c.l.b16 %v336
  %v818 = vunpack.c.h.b16 %v336
  %v819 = vunpack.c.l.b16 %v337
  %v820 = vunpack.c.l.b16 %v338
  %v821 = vunpack.c.h.b16 %v338
  %v822 = vunpack.c.l.b16 %v339
  %v823 = vunpack.c.h.b16 %v339
  %v824 = vunpack.c.l.b16 %v340
  %v825 = vunpack.c.l.b16 %v341
  %v826 = vunpack.c.h.b16 %v341
  %v827 = vunpack.c.l.b16 %v342
  %v828 = vunpack.c.h.b16 %v342
  %v829 = vunpack.c.l.b16 %v343
  %v830 = vunpack.c.l.b16 %v344
  %v831 = vunpack.c.h.b16 %v344
  %v832 = vunpack.c.l.b16 %v345
  %v833 = vunpack.c.h.b16 %v345
  %v834 = vunpack.c.l.b16 %v346
  %v835 = vunpack.c.l.b16 %v347
  %v836 = vunpack.c.h.b16 %v347
  %v837 = vunpack.c.l.b16 %v348
  %v838 = vunpack.c.h.b16 %v348
  %v839 = vunpack.c.l.b16 %v349
  %v840 = vunpack.c.l.b16 %v350
  %v841 = vunpack.c.h.b16 %v350
  %v842 = vunpack.c.l.b16 %v351
  %v843 = vunpack.c.h.b16 %v351
  %v844 = vunpack.c.l.b16 %v352
  %v845 = vunpack.c.l.b16 %v353
  %v846 = vunpack.c.h.b16 %v353
  %v847 = vunpack.c.l.b16 %v354
  %v848 = vunpack.c.h.b16 %v354
  %v849 = vunpack.c.l.b16 %v355
  %v850 = vunpack.c.l.b16 %v356
  %v851 = vunpack.c.h.b16 %v356
  %v852 = vunpack.c.l.b16 %v357
  %v853 = vunpack.c.h.b16 %v357
  %v854 = vunpack.c.l.b16 %v358
  %v855 = vunpack.c.l.b16 %v359
  %v856 = vunpack.c.h.b16 %v359
  %v857 = vunpack.c.l.b16 %v360
  %v858 = vunpack.c.h.b16 %v360
  %v859 = vunpack.c.l.b16 %v361
  %v860 = vunpack.c.l.b16 %v362
  %v861 = vunpack.c.h.b16 %v362
  %v862 = vunpack.c.l.b16 %v363
  %v863 = vunpack.c.h.b16 %v363
  %v864 = vunpack.c.l.b16 %v364
  %v865 = vunpack.c.l.b16 %v365
  %v866 = vunpack.c.h.b16 %v365
  %v867 = vunpack.c.l.b16 %v366
  %v868 = vunpack.c.h.b16 %v366
  %v869 = vunpack.c.l.b16 %v367
  %v870 = vunpack.c.l.b16 %v368
  %v871 = vunpack.c.h.b16 %v368
  %v872 = vunpack.c.l.b16 %v369
  %v873 = vunpack.c.h.b16 %v369
  %v874 = vunpack.c.l.b16 %v370
  %v875 = vunpack.c.l.b16 %v371
  %v876 = vunpack.c.h.b16 %v371
  %v877 = vunpack.c.l.b16 %v372
  %v878 = vunpack.c.h.b16 %v372
  %v879 = vunpack.c.l.b16 %v373
  %v880 = vunpack.c.l.b16 %v374
  %v881 = vunpack.c.h.b16 %v374
  %v882 = vunpack.c.l.b16 %v375
  %v883 = vunpack.c.h.b16 %v375
  %v884 = vunpack.c.l.b16 %v376
  %v885 = vunpack.c.l.b16 %v377
  %v886 = vunpack.c.h.b16 %v377
  %v887 = vunpack.c.l.b16 %v378
  %v888 = vunpack.c.h.b16 %v378
  %v889 = vunpack.c.l.b16 %v379
  %v890 = vunpack.c.l.b16 %v380
  %v891 = vunpack.c.h.b16 %v380
  %v892 = vunpack.c.l.b16 %v381
  %v893 = vunpack.c.h.b16 %v381
  %v894 = vunpack.c.l.b16 %v382
  %v895 = vunpack.c.l.b16 %v383
  %v896 = vunpack.c.h.b16 %v383
  %v897 = vunpack.c.l.b16 %v384
  %v898 = vunpack.c.h.b16 %v384
  %v899 = vunpack.c.l.b16 %v385
  %v900 = vunpack.c.l.b16 %v386
  %v901 = vunpack.c.h.b16 %v386
  %v902 = vunpack.c.l.b16 %v387
  %v903 = vunpack.c.h.b16 %v387
  %v904 = vunpack.c.l.b16 %v388
  %v905 = vunpack.c.l.b16 %v389
  %v906 = vunpack.c.h.b16 %v389
  %v907 = vunpack.c.l.b16 %v390
  %v908 = vunpack.c.h.b16 %v390
  %v909 = vunpack.c.l.b16 %v391
  %v910 = vunpack.c.l.b16 %v392
  %v911 = vunpack.c.h.b16 %v392
  %v912 = vunpack.c.l.b16 %v393
  %v913 = vunpack.c.h.b16 %v393
  %v914 = vunpack.c.l.b16 %v394
  %v915 = vunpack.c.l.b16 %v395
  %v916 = vunpack.c.h.b16 %v395
  %v917 = vunpack.c.l.b16 %v396
  %v918 = vunpack.c.h.b16 %v396
  %v919 = vunpack.c.l.b16 %v397
  %v920 = vunpack.c.l.b16 %v398
  %v921 = vunpack.c.h.b16 %v398
  %v922 = vunpack.c.l.b16 %v399
  %v923 = vunpack.c.h.b16 %v399
  %v924 = vunpack.c.l.b16 %v400
  %v925 = vunpack.c.l.b16 %v401
  %v926 = vunpack.c.h.b16 %v401
  %v927 = vunpack.c.l.b16 %v402
  %v928 = vunpack.c.h.b16 %v402
  %v929 = vunpack.c.l.b16 %v403
  %v930 = vunpack.c.l.b16 %v404
  %v931 = vunpack.c.h.b16 %v404
  %v932 = vunpack.c.l.b16 %v405
  %v933 = vunpack.c.h.b16 %v405
  %v934 = vunpack.c.l.b16 %v406
  %v935 = vunpack.c.l.b16 %v407
  %v936 = vunpack.c.h.b16 %v407
  %v937 = vunpack.c.l.b16 %v408
  %v938 = vunpack.c.h.b16 %v408
  %v939 = vunpack.c.l.b16 %v409
  %v940 = vunpack.c.l.b16 %v410
  %v941 = vunpack.c.h.b16 %v410
  %v942 = vunpack.c.l.b16 %v411
  %v943 = vunpack.c.h.b16 %v411
  %v944 = vunpack.c.l.b16 %v412
  %v945 = vunpack.c.l.b16 %v413
  %v946 = vunpack.c.h.b16 %v413
  %v947 = vunpack.c.l.b16 %v414
  %v948 = vunpack.c.h.b16 %v414
  %v949 = vunpack.c.l.b16 %v415
  %v950 = vunpack.c.l.b16 %v416
  %v951 = vunpack.c.h.b16 %v416
  %v952 = vunpack.c.l.b16 %v417
  %v953 = vunpack.c.h.b16 %v417
  %v954 = vunpack.c.l.b16 %v418
  %v955 = vunpack.c.l.b16 %v419
  %v956 = vunpack.c.h.b16 %v419
  %v957 = vunpack.c.l.b16 %v420
  %v958 = vunpack.c.h.b16 %v420
  %v959 = vunpack.c.l.b16 %v421
  %v960 = vunpack.c.l.b16 %v422
  %v961 = vunpack.c.h.b16 %v422
  %v962 = vunpack.c.l.b16 %v423
  %v963 = vunpack.c.h.b16 %v423
  %v964 = vunpack.c.l.b16 %v424
  %v965 = vunpack.c.l.b16 %v425
  %v966 = vunpack.c.h.b16 %v425
  %v967 = vunpack.c.l.b16 %v426
  %v968 = vunpack.c.h.b16 %v426
  %v969 = vunpack.c.l.b16 %v427
  %v970 = vunpack.c.l.b16 %v428
  %v971 = vunpack.c.h.b16 %v428
  %v972 = vunpack.c.l.b16 %v429
  %v973 = vunpack.c.h.b16 %v429
  %v974 = vunpack.c.l.b16 %v430
  %v975 = vunpack.c.l.b16 %v431
  %v976 = vunpack.c.h.b16 %v431
  %v977 = vunpack.c.l.b16 %v432
  %v978 = vunpack.c.h.b16 %v432
  %v979 = vunpack.c.l.b16 %v433
  %v980 = vunpack.c.l.b16 %v434
  %v981 = vunpack.c.h.b16 %v434
  %v982 = vunpack.c.l.b16 %v435
  %v983 = vunpack.c.h.b16 %v435
  %v984 = vunpack.c.l.b16 %v436
  %v985 = vunpack.c.l.b16 %v437
  %v986 = vunpack.c.h.b16 %v437
  %v987 = vunpack.c.l.b16 %v438
  %v988 = vunpack.c.h.b16 %v438
  %v989 = vunpack.c.l.b16 %v439
  %v990 = vunpack.c.l.b16 %v440
  %v991 = vunpack.c.h.b16 %v440
  %v992 = vunpack.c.l.b16 %v441
  %v993 = vunpack.c.h.b16 %v441
  %v994 = vunpack.c.l.b16 %v442
  %v995 = vunpack.c.l.b16 %v443
  %v996 = vunpack.c.h.b16 %v443
  %v997 = vunpack.c.l.b16 %v444
  %v998 = vunpack.c.h.b16 %v444
  %v999 = vunpack.c.l.b16 %v445
  %v1000 = vunpack.c.l.b16 %v446
  %v1001 = vunpack.c.h.b16 %v446
  %v1002 = vunpack.c.l.b16 %v447
  %v1003 = vunpack.c.h.b16 %v447
  %v1004 = vunpack.c.l.b16 %v448
  %v1005 = vunpack.c.l.b16 %v449
  %v1006 = vunpack.c.h.b16 %v449
  %v1007 = vunpack.c.l.b16 %v450
  %v1008 = vunpack.c.h.b16 %v450
  %v1009 = vunpack.c.l.b16 %v451
  %v1010 = vunpack.c.l.b16 %v452
  %v1011 = vunpack.c.h.b16 %v452
  %v1012 = vunpack.c.l.b16 %v453
  %v1013 = vunpack.c.h.b16 %v453
  %v1014 = vunpack.c.l.b16 %v454
  %v1015 = vpack.c.b16 %v695, %v690
  %v1016 = vpack.c.b16 %v696, %v691
  %v1017 = vpack.c.b16 %v697, %v692
  %v1018 = vpack.c.b16 %v698, %v693
  %v1019 = vpack.c.b16 %v699, %v694
  %v1020 = vpack.c.b16 %v705, %v700
  %v1021 = vpack.c.b16 %v706, %v701
  %v1022 = vpack.c.b16 %v707, %v702
  %v1023 = vpack.c.b16 %v708, %v703
  %v1024 = vpack.c.b16 %v709, %v704
  %v1025 = vpack.c.b16 %v715, %v710
  %v1026 = vpack.c.b16 %v716, %v711
  %v1027 = vpack.c.b16 %v717, %v712
  %v1028 = vpack.c.b16 %v718, %v713
  %v1029 = vpack.c.b16 %v719, %v714
  %v1030 = vpack.c.b16 %v725, %v720
  %v1031 = vpack.c.b16 %v726, %v721
  %v1032 = vpack.c.b16 %v727, %v722
  %v1033 = vpack.c.b16 %v728, %v723
  %v1034 = vpack.c.b16 %v729, %v724
  %v1035 = vpack.c.b16 %v735, %v730
  %v1036 = vpack.c.b16 %v736, %v731
  %v1037 = vpack.c.b16 %v737, %v732
  %v1038 = vpack.c.b16 %v738, %v733
  %v1039 = vpack.c.b16 %v739, %v734
  %v1040 = vpack.c.b16 %v745, %v740
  %v1041 = vpack.c.b16 %v746, %v741
  %v1042 = vpack.c.b16 %v747, %v742
  %v1043 = vpack.c.b16 %v748, %v743
  %v1044 = vpack.c.b16 %v749, %v744
  %v1045 = vpack.c.b16 %v755, %v750
  %v1046 = vpack.c.b16 %v756, %v751
  %v1047 = vpack.c.b16 %v757, %v752
  %v1048 = vpack.c.b16 %v758, %v753
  %v1049 = vpack.c.b16 %v759, %v754
  %v1050 = vpack.c.b16 %v765, %v760
  %v1051 = vpack.c.b16 %v766, %v761
  %v1052 = vpack.c.b16 %v767, %v762
  %v1053 = vpack.c.b16 %v768, %v763
  %v1054 = vpack.c.b16 %v769, %v764
  %v1055 = vpack.c.b16 %v775, %v770
  %v1056 = vpack.c.b16 %v776, %v771
  %v1057 = vpack.c.b16 %v777, %v772
  %v1058 = vpack.c.b16 %v778, %v773
  %v1059 = vpack.c.b16 %v779, %v774
  %v1060 = vpack.c.b16 %v785, %v780
  %v1061 = vpack.c.b16 %v786, %v781
  %v1062 = vpack.c.b16 %v787, %v782
  %v1063 = vpack.c.b16 %v788, %v783
  %v1064 = vpack.c.b16 %v789, %v784
  %v1065 = vpack.c.b16 %v795, %v790
  %v1066 = vpack.c.b16 %v796, %v791
  %v1067 = vpack.c.b16 %v797, %v792
  %v1068 = vpack.c.b16 %v798, %v793
  %v1069 = vpack.c.b16 %v799, %v794
  %v1070 = vpack.c.b16 %v805, %v800
  %v1071 = vpack.c.b16 %v806, %v801
  %v1072 = vpack.c.b16 %v807, %v802
  %v1073 = vpack.c.b16 %v808, %v803
  %v1074 = vpack.c.b16 %v809, %v804
  %v1075 = vpack.c.b16 %v815, %v810
  %v1076 = vpack.c.b16 %v816, %v811
  %v1077 = vpack.c.b16 %v817, %v812
  %v1078 = vpack.c.b16 %v818, %v813
  %v1079 = vpack.c.b16 %v819, %v814
  %v1080 = vpack.c.b16 %v825, %v820
  %v1081 = vpack.c.b16 %v826, %v821
  %v1082 = vpack.c.b16 %v827, %v822
  %v1083 = vpack.c.b16 %v828, %v823
  %v1084 = vpack.c.b16 %v829, %v824
  %v1085 = vpack.c.b16 %v835, %v830
  %v1086 = vpack.c.b16 %v836, %v831
  %v1087 = vpack.c.b16 %v837, %v832
  %v1088 = vpack.c.b16 %v838, %v833
  %v1089 = vpack.c.b16 %v839, %v834
  %v1090 = vpack.c.b16 %v845, %v840
  %v1091 = vpack.c.b16 %v846, %v841
  %v1092 = vpack.c.b16 %v847, %v842
  %v1093 = vpack.c.b16 %v848, %v843
  %v1094 = vpack.c.b16 %v849, %v844
  %v1095 = vpack.c.b16 %v855, %v850
  %v1096 = vpack.c.b16 %v856, %v851
  %v1097 = vpack.c.b16 %v857, %v852
  %v1098 = vpack.c.b16 %v858, %v853
  %v1099 = vpack.c.b16 %v859, %v854
  %v1100 = vpack.c.b16 %v865, %v860
  %v1101 = vpack.c.b16 %v866, %v861
  %v1102 = vpack.c.b16 %v867, %v862
  %v1103 = vpack.c.b16 %v868, %v863
  %v1104 = vpack.c.b16 %v869, %v864
  %v1105 = vpack.c.b16 %v875, %v870
  %v1106 = vpack.c.b16 %v876, %v871
  %v1107 = vpack.c.b16 %v877, %v872
  %v1108 = vpack.c.b16 %v878, %v873
  %v1109 = vpack.c.b16 %v879, %v874
  %v1110 = vpack.c.b16 %v885, %v880
  %v1111 = vpack.c.b16 %v886, %v881
  %v1112 = vpack.c.b16 %v887, %v882
  %v1113 = vpack.c.b16 %v888, %v883
  %v1114 = vpack.c.b16 %v889, %v884
  %v1115 = vpack.c.b16 %v895, %v890
  %v1116 = vpack.c.b16 %v896, %v891
  %v1117 = vpack.c.b16 %v897, %v892
  %v1118 = vpack.c.b16 %v898, %v893
  %v1119 = vpack.c.b16 %v899, %v894
  %v1120 = vpack.c.b16 %v905, %v900
  %v1121 = vpack.c.b16 %v906, %v901
  %v1122 = vpack.c.b16 %v907, %v902
  %v1123 = vpack.c.b16 %v908, %v903
  %v1124 = vpack.c.b16 %v909, %v904
  %v1125 = vpack.c.b16 %v915, %v910
  %v1126 = vpack.c.b16 %v916, %v911
  %v1127 = vpack.c.b16 %v917, %v912
  %v1128 = vpack.c.b16 %v918, %v913
  %v1129 = vpack.c.b16 %v919, %v914
  %v1130 = vpack.c.b16 %v925, %v920
  %v1131 = vpack.c.b16 %v926, %v921
  %v1132 = vpack.c.b16 %v927, %v922
  %v1133 = vpack.c.b16 %v928, %v923
  %v1134 = vpack.c.b16 %v929, %v924
  %v1135 = vpack.c.b16 %v935, %v930
  %v1136 = vpack.c.b16 %v936, %v931
  %v1137 = vpack.c.b16 %v937, %v932
  %v1138 = vpack.c.b16 %v938, %v933
  %v1139 = vpack.c.b16 %v939, %v934
  %v1140 = vpack.c.b16 %v945, %v940
  %v1141 = vpack.c.b16 %v946, %v941
  %v1142 = vpack.c.b16 %v947, %v942
  %v1143 = vpack.c.b16 %v948, %v943
  %v1144 = vpack.c.b16 %v949, %v944
  %v1145 = vpack.c.b16 %v955, %v950
  %v1146 = vpack.c.b16 %v956, %v951
  %v1147 = vpack.c.b16 %v957, %v952
  %v1148 = vpack.c.b16 %v958, %v953
  %v1149 = vpack.c.b16 %v959, %v954
  %v1150 = vpack.c.b16 %v965, %v960
  %v1151 = vpack.c.b16 %v966, %v961
  %v1152 = vpack.c.b16 %v967, %v962
  %v1153 = vpack.c.b16 %v968, %v963
  %v1154 = vpack.c.b16 %v969, %v964
  %v1155 = vpack.c.b16 %v975, %v970
  %v1156 = vpack.c.b16 %v976, %v971
  %v1157 = vpack.c.b16 %v977, %v972
  %v1158 = vpack.c.b16 %v978, %v973
  %v1159 = vpack.c.b16 %v979, %v974
  %v1160 = vpack.c.b16 %v985, %v980
  %v1161 = vpack.c.b16 %v986, %v981
  %v1162 = vpack.c.b16 %v987, %v982
  %v1163 = vpack.c.b16 %v988, %v983
  %v1164 = vpack.c.b16 %v989, %v984
  %v1165 = vpack.c.b16 %v995, %v990
  %v1166 = vpack.c.b16 %v996, %v991
  %v1167 = vpack.c.b16 %v997, %v992
  %v1168 = vpack.c.b16 %v998, %v993
  %v1169 = vpack.c.b16 %v999, %v994
  %v1170 = vpack.c.b16 %v1005, %v1000
  %v1171 = vpack.c.b16 %v1006, %v1001
  %v1172 = vpack.c.b16 %v1007, %v1002
  %v1173 = vpack.c.b16 %v1008, %v1003
  %v1174 = vpack.c.b16 %v1009, %v1004
  %v1175 = vpack.c.b16 %v1010, %v1010
  %v1176 = vpack.c.b16 %v1011, %v1011
  %v1177 = vpack.c.b16 %v1012, %v1012
  %v1178 = vpack.c.b16 %v1013, %v1013
  %v1179 = vpack.c.b16 %v1014, %v1014
  %1345 = vmatpush.bf16.msra.mxu0 %v462
  %1346 = vmatpush.bf16.msra.mxu0 %v461
  %1347 = vmatpush.bf16.msra.mxu0 %v460
  %1348 = vmatpush.bf16.msra.mxu0 %v459
  %1349 = vmatpush.bf16.msra.mxu0 %v458
  %1350 = vmatpush.bf16.msra.mxu0 %v457
  %1351 = vmatpush.bf16.msra.mxu0 %v456
  %1352 = vmatpush.bf16.msra.mxu0 %v455
  %1353 = vmatmul.bf16.gmra.mxu0 %v1015
  %v1354 = vpop.f32.mrf.mxu0
  %v1355 = vadd.f32 0.0, %v1354
  %v1356 = vpop.f32.mrf.mxu0
  %v1357 = vadd.f32 0.0, %v1356
  %1358 = vmatmul.bf16.gmra.mxu0 %v1020
  %v1359 = vpop.f32.mrf.mxu0
  %v1360 = vadd.f32 0.0, %v1359
  %v1361 = vpop.f32.mrf.mxu0
  %v1362 = vadd.f32 0.0, %v1361
  %1363 = vmatmul.bf16.gmra.mxu0 %v1025
  %v1364 = vpop.f32.mrf.mxu0
  %v1365 = vadd.f32 0.0, %v1364
  %v1366 = vpop.f32.mrf.mxu0
  %v1367 = vadd.f32 0.0, %v1366
  %1368 = vmatmul.bf16.gmra.mxu0 %v1030
  %v1369 = vpop.f32.mrf.mxu0
  %v1370 = vadd.f32 0.0, %v1369
  %v1371 = vpop.f32.mrf.mxu0
  %v1372 = vadd.f32 0.0, %v1371
  %1373 = vmatmul.bf16.gmra.mxu0 %v1035
  %v1374 = vpop.f32.mrf.mxu0
  %v1375 = vadd.f32 0.0, %v1374
  %v1376 = vpop.f32.mrf.mxu0
  %v1377 = vadd.f32 0.0, %v1376
  %1378 = vmatmul.bf16.gmra.mxu0 %v1040
  %v1379 = vpop.f32.mrf.mxu0
  %v1380 = vadd.f32 0.0, %v1379
  %v1381 = vpop.f32.mrf.mxu0
  %v1382 = vadd.f32 0.0, %v1381
  %1383 = vmatmul.bf16.gmra.mxu0 %v1045
  %v1384 = vpop.f32.mrf.mxu0
  %v1385 = vadd.f32 0.0, %v1384
  %v1386 = vpop.f32.mrf.mxu0
  %v1387 = vadd.f32 0.0, %v1386
  %1388 = vmatmul.bf16.gmra.mxu0 %v1050
  %v1389 = vpop.f32.mrf.mxu0
  %v1390 = vadd.f32 0.0, %v1389
  %v1391 = vpop.f32.mrf.mxu0
  %v1392 = vadd.f32 0.0, %v1391
  %1393 = vmatmul.bf16.gmra.mxu0 %v1055
  %v1394 = vpop.f32.mrf.mxu0
  %v1395 = vadd.f32 0.0, %v1394
  %v1396 = vpop.f32.mrf.mxu0
  %v1397 = vadd.f32 0.0, %v1396
  %1398 = vmatmul.bf16.gmra.mxu0 %v1060
  %v1399 = vpop.f32.mrf.mxu0
  %v1400 = vadd.f32 0.0, %v1399
  %v1401 = vpop.f32.mrf.mxu0
  %v1402 = vadd.f32 0.0, %v1401
  %1403 = vmatmul.bf16.gmra.mxu0 %v1065
  %v1404 = vpop.f32.mrf.mxu0
  %v1405 = vadd.f32 0.0, %v1404
  %v1406 = vpop.f32.mrf.mxu0
  %v1407 = vadd.f32 0.0, %v1406
  %1408 = vmatmul.bf16.gmra.mxu0 %v1070
  %v1409 = vpop.f32.mrf.mxu0
  %v1410 = vadd.f32 0.0, %v1409
  %v1411 = vpop.f32.mrf.mxu0
  %v1412 = vadd.f32 0.0, %v1411
  %1413 = vmatmul.bf16.gmra.mxu0 %v1075
  %v1414 = vpop.f32.mrf.mxu0
  %v1415 = vadd.f32 0.0, %v1414
  %v1416 = vpop.f32.mrf.mxu0
  %v1417 = vadd.f32 0.0, %v1416
  %1418 = vmatmul.bf16.gmra.mxu0 %v1080
  %v1419 = vpop.f32.mrf.mxu0
  %v1420 = vadd.f32 0.0, %v1419
  %v1421 = vpop.f32.mrf.mxu0
  %v1422 = vadd.f32 0.0, %v1421
  %1423 = vmatmul.bf16.gmra.mxu0 %v1085
  %v1424 = vpop.f32.mrf.mxu0
  %v1425 = vadd.f32 0.0, %v1424
  %v1426 = vpop.f32.mrf.mxu0
  %v1427 = vadd.f32 0.0, %v1426
  %1428 = vmatmul.bf16.gmra.mxu0 %v1090
  %v1429 = vpop.f32.mrf.mxu0
  %v1430 = vadd.f32 0.0, %v1429
  %v1431 = vpop.f32.mrf.mxu0
  %v1432 = vadd.f32 0.0, %v1431
  %1433 = vmatmul.bf16.gmra.mxu0 %v1095
  %v1434 = vpop.f32.mrf.mxu0
  %v1435 = vadd.f32 0.0, %v1434
  %v1436 = vpop.f32.mrf.mxu0
  %v1437 = vadd.f32 0.0, %v1436
  %1438 = vmatmul.bf16.gmra.mxu0 %v1100
  %v1439 = vpop.f32.mrf.mxu0
  %v1440 = vadd.f32 0.0, %v1439
  %v1441 = vpop.f32.mrf.mxu0
  %v1442 = vadd.f32 0.0, %v1441
  %1443 = vmatmul.bf16.gmra.mxu0 %v1105
  %v1444 = vpop.f32.mrf.mxu0
  %v1445 = vadd.f32 0.0, %v1444
  %v1446 = vpop.f32.mrf.mxu0
  %v1447 = vadd.f32 0.0, %v1446
  %1448 = vmatmul.bf16.gmra.mxu0 %v1110
  %v1449 = vpop.f32.mrf.mxu0
  %v1450 = vadd.f32 0.0, %v1449
  %v1451 = vpop.f32.mrf.mxu0
  %v1452 = vadd.f32 0.0, %v1451
  %1453 = vmatmul.bf16.gmra.mxu0 %v1115
  %v1454 = vpop.f32.mrf.mxu0
  %v1455 = vadd.f32 0.0, %v1454
  %v1456 = vpop.f32.mrf.mxu0
  %v1457 = vadd.f32 0.0, %v1456
  %1458 = vmatmul.bf16.gmra.mxu0 %v1120
  %v1459 = vpop.f32.mrf.mxu0
  %v1460 = vadd.f32 0.0, %v1459
  %v1461 = vpop.f32.mrf.mxu0
  %v1462 = vadd.f32 0.0, %v1461
  %1463 = vmatmul.bf16.gmra.mxu0 %v1125
  %v1464 = vpop.f32.mrf.mxu0
  %v1465 = vadd.f32 0.0, %v1464
  %v1466 = vpop.f32.mrf.mxu0
  %v1467 = vadd.f32 0.0, %v1466
  %1468 = vmatmul.bf16.gmra.mxu0 %v1130
  %v1469 = vpop.f32.mrf.mxu0
  %v1470 = vadd.f32 0.0, %v1469
  %v1471 = vpop.f32.mrf.mxu0
  %v1472 = vadd.f32 0.0, %v1471
  %1473 = vmatmul.bf16.gmra.mxu0 %v1135
  %v1474 = vpop.f32.mrf.mxu0
  %v1475 = vadd.f32 0.0, %v1474
  %v1476 = vpop.f32.mrf.mxu0
  %v1477 = vadd.f32 0.0, %v1476
  %1478 = vmatmul.bf16.gmra.mxu0 %v1140
  %v1479 = vpop.f32.mrf.mxu0
  %v1480 = vadd.f32 0.0, %v1479
  %v1481 = vpop.f32.mrf.mxu0
  %v1482 = vadd.f32 0.0, %v1481
  %1483 = vmatmul.bf16.gmra.mxu0 %v1145
  %v1484 = vpop.f32.mrf.mxu0
  %v1485 = vadd.f32 0.0, %v1484
  %v1486 = vpop.f32.mrf.mxu0
  %v1487 = vadd.f32 0.0, %v1486
  %1488 = vmatmul.bf16.gmra.mxu0 %v1150
  %v1489 = vpop.f32.mrf.mxu0
  %v1490 = vadd.f32 0.0, %v1489
  %v1491 = vpop.f32.mrf.mxu0
  %v1492 = vadd.f32 0.0, %v1491
  %1493 = vmatmul.bf16.gmra.mxu0 %v1155
  %v1494 = vpop.f32.mrf.mxu0
  %v1495 = vadd.f32 0.0, %v1494
  %v1496 = vpop.f32.mrf.mxu0
  %v1497 = vadd.f32 0.0, %v1496
  %1498 = vmatmul.bf16.gmra.mxu0 %v1160
  %v1499 = vpop.f32.mrf.mxu0
  %v1500 = vadd.f32 0.0, %v1499
  %v1501 = vpop.f32.mrf.mxu0
  %v1502 = vadd.f32 0.0, %v1501
  %1503 = vmatmul.bf16.gmra.mxu0 %v1165
  %v1504 = vpop.f32.mrf.mxu0
  %v1505 = vadd.f32 0.0, %v1504
  %v1506 = vpop.f32.mrf.mxu0
  %v1507 = vadd.f32 0.0, %v1506
  %1508 = vmatmul.bf16.gmra.mxu0 %v1170
  %v1509 = vpop.f32.mrf.mxu0
  %v1510 = vadd.f32 0.0, %v1509
  %v1511 = vpop.f32.mrf.mxu0
  %v1512 = vadd.f32 0.0, %v1511
  %1513 = vmatmul.bf16.gmra.mxu0 %v1175
  %v1514 = vpop.f32.mrf.mxu0
  %v1515 = vadd.f32 0.0, %v1514
  %v1516 = vpop.f32.mrf.mxu0
  %1517 = vdwg.mxu0
  %1518 = vmatpush.bf16.msra.mxu0 %v470
  %1519 = vmatpush.bf16.msra.mxu0 %v469
  %1520 = vmatpush.bf16.msra.mxu0 %v468
  %1521 = vmatpush.bf16.msra.mxu0 %v467
  %1522 = vmatpush.bf16.msra.mxu0 %v466
  %1523 = vmatpush.bf16.msra.mxu0 %v465
  %1524 = vmatpush.bf16.msra.mxu0 %v464
  %1525 = vmatpush.bf16.msra.mxu0 %v463
  %1526 = vmatmul.bf16.gmra.mxu0 %v1016
  %v1527 = vpop.f32.mrf.mxu0
  %v1528 = vadd.f32 %v1355, %v1527
  %v1529 = vpop.f32.mrf.mxu0
  %v1530 = vadd.f32 %v1357, %v1529
  %1531 = vmatmul.bf16.gmra.mxu0 %v1021
  %v1532 = vpop.f32.mrf.mxu0
  %v1533 = vadd.f32 %v1360, %v1532
  %v1534 = vpop.f32.mrf.mxu0
  %v1535 = vadd.f32 %v1362, %v1534
  %1536 = vmatmul.bf16.gmra.mxu0 %v1026
  %v1537 = vpop.f32.mrf.mxu0
  %v1538 = vadd.f32 %v1365, %v1537
  %v1539 = vpop.f32.mrf.mxu0
  %v1540 = vadd.f32 %v1367, %v1539
  %1541 = vmatmul.bf16.gmra.mxu0 %v1031
  %v1542 = vpop.f32.mrf.mxu0
  %v1543 = vadd.f32 %v1370, %v1542
  %v1544 = vpop.f32.mrf.mxu0
  %v1545 = vadd.f32 %v1372, %v1544
  %1546 = vmatmul.bf16.gmra.mxu0 %v1036
  %v1547 = vpop.f32.mrf.mxu0
  %v1548 = vadd.f32 %v1375, %v1547
  %v1549 = vpop.f32.mrf.mxu0
  %v1550 = vadd.f32 %v1377, %v1549
  %1551 = vmatmul.bf16.gmra.mxu0 %v1041
  %v1552 = vpop.f32.mrf.mxu0
  %v1553 = vadd.f32 %v1380, %v1552
  %v1554 = vpop.f32.mrf.mxu0
  %v1555 = vadd.f32 %v1382, %v1554
  %1556 = vmatmul.bf16.gmra.mxu0 %v1046
  %v1557 = vpop.f32.mrf.mxu0
  %v1558 = vadd.f32 %v1385, %v1557
  %v1559 = vpop.f32.mrf.mxu0
  %v1560 = vadd.f32 %v1387, %v1559
  %1561 = vmatmul.bf16.gmra.mxu0 %v1051
  %v1562 = vpop.f32.mrf.mxu0
  %v1563 = vadd.f32 %v1390, %v1562
  %v1564 = vpop.f32.mrf.mxu0
  %v1565 = vadd.f32 %v1392, %v1564
  %1566 = vmatmul.bf16.gmra.mxu0 %v1056
  %v1567 = vpop.f32.mrf.mxu0
  %v1568 = vadd.f32 %v1395, %v1567
  %v1569 = vpop.f32.mrf.mxu0
  %v1570 = vadd.f32 %v1397, %v1569
  %1571 = vmatmul.bf16.gmra.mxu0 %v1061
  %v1572 = vpop.f32.mrf.mxu0
  %v1573 = vadd.f32 %v1400, %v1572
  %v1574 = vpop.f32.mrf.mxu0
  %v1575 = vadd.f32 %v1402, %v1574
  %1576 = vmatmul.bf16.gmra.mxu0 %v1066
  %v1577 = vpop.f32.mrf.mxu0
  %v1578 = vadd.f32 %v1405, %v1577
  %v1579 = vpop.f32.mrf.mxu0
  %v1580 = vadd.f32 %v1407, %v1579
  %1581 = vmatmul.bf16.gmra.mxu0 %v1071
  %v1582 = vpop.f32.mrf.mxu0
  %v1583 = vadd.f32 %v1410, %v1582
  %v1584 = vpop.f32.mrf.mxu0
  %v1585 = vadd.f32 %v1412, %v1584
  %1586 = vmatmul.bf16.gmra.mxu0 %v1076
  %v1587 = vpop.f32.mrf.mxu0
  %v1588 = vadd.f32 %v1415, %v1587
  %v1589 = vpop.f32.mrf.mxu0
  %v1590 = vadd.f32 %v1417, %v1589
  %1591 = vmatmul.bf16.gmra.mxu0 %v1081
  %v1592 = vpop.f32.mrf.mxu0
  %v1593 = vadd.f32 %v1420, %v1592
  %v1594 = vpop.f32.mrf.mxu0
  %v1595 = vadd.f32 %v1422, %v1594
  %1596 = vmatmul.bf16.gmra.mxu0 %v1086
  %v1597 = vpop.f32.mrf.mxu0
  %v1598 = vadd.f32 %v1425, %v1597
  %v1599 = vpop.f32.mrf.mxu0
  %v1600 = vadd.f32 %v1427, %v1599
  %1601 = vmatmul.bf16.gmra.mxu0 %v1091
  %v1602 = vpop.f32.mrf.mxu0
  %v1603 = vadd.f32 %v1430, %v1602
  %v1604 = vpop.f32.mrf.mxu0
  %v1605 = vadd.f32 %v1432, %v1604
  %1606 = vmatmul.bf16.gmra.mxu0 %v1096
  %v1607 = vpop.f32.mrf.mxu0
  %v1608 = vadd.f32 %v1435, %v1607
  %v1609 = vpop.f32.mrf.mxu0
  %v1610 = vadd.f32 %v1437, %v1609
  %1611 = vmatmul.bf16.gmra.mxu0 %v1101
  %v1612 = vpop.f32.mrf.mxu0
  %v1613 = vadd.f32 %v1440, %v1612
  %v1614 = vpop.f32.mrf.mxu0
  %v1615 = vadd.f32 %v1442, %v1614
  %1616 = vmatmul.bf16.gmra.mxu0 %v1106
  %v1617 = vpop.f32.mrf.mxu0
  %v1618 = vadd.f32 %v1445, %v1617
  %v1619 = vpop.f32.mrf.mxu0
  %v1620 = vadd.f32 %v1447, %v1619
  %1621 = vmatmul.bf16.gmra.mxu0 %v1111
  %v1622 = vpop.f32.mrf.mxu0
  %v1623 = vadd.f32 %v1450, %v1622
  %v1624 = vpop.f32.mrf.mxu0
  %v1625 = vadd.f32 %v1452, %v1624
  %1626 = vmatmul.bf16.gmra.mxu0 %v1116
  %v1627 = vpop.f32.mrf.mxu0
  %v1628 = vadd.f32 %v1455, %v1627
  %v1629 = vpop.f32.mrf.mxu0
  %v1630 = vadd.f32 %v1457, %v1629
  %1631 = vmatmul.bf16.gmra.mxu0 %v1121
  %v1632 = vpop.f32.mrf.mxu0
  %v1633 = vadd.f32 %v1460, %v1632
  %v1634 = vpop.f32.mrf.mxu0
  %v1635 = vadd.f32 %v1462, %v1634
  %1636 = vmatmul.bf16.gmra.mxu0 %v1126
  %v1637 = vpop.f32.mrf.mxu0
  %v1638 = vadd.f32 %v1465, %v1637
  %v1639 = vpop.f32.mrf.mxu0
  %v1640 = vadd.f32 %v1467, %v1639
  %1641 = vmatmul.bf16.gmra.mxu0 %v1131
  %v1642 = vpop.f32.mrf.mxu0
  %v1643 = vadd.f32 %v1470, %v1642
  %v1644 = vpop.f32.mrf.mxu0
  %v1645 = vadd.f32 %v1472, %v1644
  %1646 = vmatmul.bf16.gmra.mxu0 %v1136
  %v1647 = vpop.f32.mrf.mxu0
  %v1648 = vadd.f32 %v1475, %v1647
  %v1649 = vpop.f32.mrf.mxu0
  %v1650 = vadd.f32 %v1477, %v1649
  %1651 = vmatmul.bf16.gmra.mxu0 %v1141
  %v1652 = vpop.f32.mrf.mxu0
  %v1653 = vadd.f32 %v1480, %v1652
  %v1654 = vpop.f32.mrf.mxu0
  %v1655 = vadd.f32 %v1482, %v1654
  %1656 = vmatmul.bf16.gmra.mxu0 %v1146
  %v1657 = vpop.f32.mrf.mxu0
  %v1658 = vadd.f32 %v1485, %v1657
  %v1659 = vpop.f32.mrf.mxu0
  %v1660 = vadd.f32 %v1487, %v1659
  %1661 = vmatmul.bf16.gmra.mxu0 %v1151
  %v1662 = vpop.f32.mrf.mxu0
  %v1663 = vadd.f32 %v1490, %v1662
  %v1664 = vpop.f32.mrf.mxu0
  %v1665 = vadd.f32 %v1492, %v1664
  %1666 = vmatmul.bf16.gmra.mxu0 %v1156
  %v1667 = vpop.f32.mrf.mxu0
  %v1668 = vadd.f32 %v1495, %v1667
  %v1669 = vpop.f32.mrf.mxu0
  %v1670 = vadd.f32 %v1497, %v1669
  %1671 = vmatmul.bf16.gmra.mxu0 %v1161
  %v1672 = vpop.f32.mrf.mxu0
  %v1673 = vadd.f32 %v1500, %v1672
  %v1674 = vpop.f32.mrf.mxu0
  %v1675 = vadd.f32 %v1502, %v1674
  %1676 = vmatmul.bf16.gmra.mxu0 %v1166
  %v1677 = vpop.f32.mrf.mxu0
  %v1678 = vadd.f32 %v1505, %v1677
  %v1679 = vpop.f32.mrf.mxu0
  %v1680 = vadd.f32 %v1507, %v1679
  %1681 = vmatmul.bf16.gmra.mxu0 %v1171
  %v1682 = vpop.f32.mrf.mxu0
  %v1683 = vadd.f32 %v1510, %v1682
  %v1684 = vpop.f32.mrf.mxu0
  %v1685 = vadd.f32 %v1512, %v1684
  %1686 = vmatmul.bf16.gmra.mxu0 %v1176
  %v1687 = vpop.f32.mrf.mxu0
  %v1688 = vadd.f32 %v1515, %v1687
  %v1689 = vpop.f32.mrf.mxu0
  %1690 = vdwg.mxu0
  %1691 = vmatpush.bf16.msra.mxu0 %v478
  %1692 = vmatpush.bf16.msra.mxu0 %v477
  %1693 = vmatpush.bf16.msra.mxu0 %v476
  %1694 = vmatpush.bf16.msra.mxu0 %v475
  %1695 = vmatpush.bf16.msra.mxu0 %v474
  %1696 = vmatpush.bf16.msra.mxu0 %v473
  %1697 = vmatpush.bf16.msra.mxu0 %v472
  %1698 = vmatpush.bf16.msra.mxu0 %v471
  %1699 = vmatmul.bf16.gmra.mxu0 %v1017
  %v1700 = vpop.f32.mrf.mxu0
  %v1701 = vadd.f32 %v1528, %v1700
  %v1702 = vpop.f32.mrf.mxu0
  %v1703 = vadd.f32 %v1530, %v1702
  %1704 = vmatmul.bf16.gmra.mxu0 %v1022
  %v1705 = vpop.f32.mrf.mxu0
  %v1706 = vadd.f32 %v1533, %v1705
  %v1707 = vpop.f32.mrf.mxu0
  %v1708 = vadd.f32 %v1535, %v1707
  %1709 = vmatmul.bf16.gmra.mxu0 %v1027
  %v1710 = vpop.f32.mrf.mxu0
  %v1711 = vadd.f32 %v1538, %v1710
  %v1712 = vpop.f32.mrf.mxu0
  %v1713 = vadd.f32 %v1540, %v1712
  %1714 = vmatmul.bf16.gmra.mxu0 %v1032
  %v1715 = vpop.f32.mrf.mxu0
  %v1716 = vadd.f32 %v1543, %v1715
  %v1717 = vpop.f32.mrf.mxu0
  %v1718 = vadd.f32 %v1545, %v1717
  %1719 = vmatmul.bf16.gmra.mxu0 %v1037
  %v1720 = vpop.f32.mrf.mxu0
  %v1721 = vadd.f32 %v1548, %v1720
  %v1722 = vpop.f32.mrf.mxu0
  %v1723 = vadd.f32 %v1550, %v1722
  %1724 = vmatmul.bf16.gmra.mxu0 %v1042
  %v1725 = vpop.f32.mrf.mxu0
  %v1726 = vadd.f32 %v1553, %v1725
  %v1727 = vpop.f32.mrf.mxu0
  %v1728 = vadd.f32 %v1555, %v1727
  %1729 = vmatmul.bf16.gmra.mxu0 %v1047
  %v1730 = vpop.f32.mrf.mxu0
  %v1731 = vadd.f32 %v1558, %v1730
  %v1732 = vpop.f32.mrf.mxu0
  %v1733 = vadd.f32 %v1560, %v1732
  %1734 = vmatmul.bf16.gmra.mxu0 %v1052
  %v1735 = vpop.f32.mrf.mxu0
  %v1736 = vadd.f32 %v1563, %v1735
  %v1737 = vpop.f32.mrf.mxu0
  %v1738 = vadd.f32 %v1565, %v1737
  %1739 = vmatmul.bf16.gmra.mxu0 %v1057
  %v1740 = vpop.f32.mrf.mxu0
  %v1741 = vadd.f32 %v1568, %v1740
  %v1742 = vpop.f32.mrf.mxu0
  %v1743 = vadd.f32 %v1570, %v1742
  %1744 = vmatmul.bf16.gmra.mxu0 %v1062
  %v1745 = vpop.f32.mrf.mxu0
  %v1746 = vadd.f32 %v1573, %v1745
  %v1747 = vpop.f32.mrf.mxu0
  %v1748 = vadd.f32 %v1575, %v1747
  %1749 = vmatmul.bf16.gmra.mxu0 %v1067
  %v1750 = vpop.f32.mrf.mxu0
  %v1751 = vadd.f32 %v1578, %v1750
  %v1752 = vpop.f32.mrf.mxu0
  %v1753 = vadd.f32 %v1580, %v1752
  %1754 = vmatmul.bf16.gmra.mxu0 %v1072
  %v1755 = vpop.f32.mrf.mxu0
  %v1756 = vadd.f32 %v1583, %v1755
  %v1757 = vpop.f32.mrf.mxu0
  %v1758 = vadd.f32 %v1585, %v1757
  %1759 = vmatmul.bf16.gmra.mxu0 %v1077
  %v1760 = vpop.f32.mrf.mxu0
  %v1761 = vadd.f32 %v1588, %v1760
  %v1762 = vpop.f32.mrf.mxu0
  %v1763 = vadd.f32 %v1590, %v1762
  %1764 = vmatmul.bf16.gmra.mxu0 %v1082
  %v1765 = vpop.f32.mrf.mxu0
  %v1766 = vadd.f32 %v1593, %v1765
  %v1767 = vpop.f32.mrf.mxu0
  %v1768 = vadd.f32 %v1595, %v1767
  %1769 = vmatmul.bf16.gmra.mxu0 %v1087
  %v1770 = vpop.f32.mrf.mxu0
  %v1771 = vadd.f32 %v1598, %v1770
  %v1772 = vpop.f32.mrf.mxu0
  %v1773 = vadd.f32 %v1600, %v1772
  %1774 = vmatmul.bf16.gmra.mxu0 %v1092
  %v1775 = vpop.f32.mrf.mxu0
  %v1776 = vadd.f32 %v1603, %v1775
  %v1777 = vpop.f32.mrf.mxu0
  %v1778 = vadd.f32 %v1605, %v1777
  %1779 = vmatmul.bf16.gmra.mxu0 %v1097
  %v1780 = vpop.f32.mrf.mxu0
  %v1781 = vadd.f32 %v1608, %v1780
  %v1782 = vpop.f32.mrf.mxu0
  %v1783 = vadd.f32 %v1610, %v1782
  %1784 = vmatmul.bf16.gmra.mxu0 %v1102
  %v1785 = vpop.f32.mrf.mxu0
  %v1786 = vadd.f32 %v1613, %v1785
  %v1787 = vpop.f32.mrf.mxu0
  %v1788 = vadd.f32 %v1615, %v1787
  %1789 = vmatmul.bf16.gmra.mxu0 %v1107
  %v1790 = vpop.f32.mrf.mxu0
  %v1791 = vadd.f32 %v1618, %v1790
  %v1792 = vpop.f32.mrf.mxu0
  %v1793 = vadd.f32 %v1620, %v1792
  %1794 = vmatmul.bf16.gmra.mxu0 %v1112
  %v1795 = vpop.f32.mrf.mxu0
  %v1796 = vadd.f32 %v1623, %v1795
  %v1797 = vpop.f32.mrf.mxu0
  %v1798 = vadd.f32 %v1625, %v1797
  %1799 = vmatmul.bf16.gmra.mxu0 %v1117
  %v1800 = vpop.f32.mrf.mxu0
  %v1801 = vadd.f32 %v1628, %v1800
  %v1802 = vpop.f32.mrf.mxu0
  %v1803 = vadd.f32 %v1630, %v1802
  %1804 = vmatmul.bf16.gmra.mxu0 %v1122
  %v1805 = vpop.f32.mrf.mxu0
  %v1806 = vadd.f32 %v1633, %v1805
  %v1807 = vpop.f32.mrf.mxu0
  %v1808 = vadd.f32 %v1635, %v1807
  %1809 = vmatmul.bf16.gmra.mxu0 %v1127
  %v1810 = vpop.f32.mrf.mxu0
  %v1811 = vadd.f32 %v1638, %v1810
  %v1812 = vpop.f32.mrf.mxu0
  %v1813 = vadd.f32 %v1640, %v1812
  %1814 = vmatmul.bf16.gmra.mxu0 %v1132
  %v1815 = vpop.f32.mrf.mxu0
  %v1816 = vadd.f32 %v1643, %v1815
  %v1817 = vpop.f32.mrf.mxu0
  %v1818 = vadd.f32 %v1645, %v1817
  %1819 = vmatmul.bf16.gmra.mxu0 %v1137
  %v1820 = vpop.f32.mrf.mxu0
  %v1821 = vadd.f32 %v1648, %v1820
  %v1822 = vpop.f32.mrf.mxu0
  %v1823 = vadd.f32 %v1650, %v1822
  %1824 = vmatmul.bf16.gmra.mxu0 %v1142
  %v1825 = vpop.f32.mrf.mxu0
  %v1826 = vadd.f32 %v1653, %v1825
  %v1827 = vpop.f32.mrf.mxu0
  %v1828 = vadd.f32 %v1655, %v1827
  %1829 = vmatmul.bf16.gmra.mxu0 %v1147
  %v1830 = vpop.f32.mrf.mxu0
  %v1831 = vadd.f32 %v1658, %v1830
  %v1832 = vpop.f32.mrf.mxu0
  %v1833 = vadd.f32 %v1660, %v1832
  %1834 = vmatmul.bf16.gmra.mxu0 %v1152
  %v1835 = vpop.f32.mrf.mxu0
  %v1836 = vadd.f32 %v1663, %v1835
  %v1837 = vpop.f32.mrf.mxu0
  %v1838 = vadd.f32 %v1665, %v1837
  %1839 = vmatmul.bf16.gmra.mxu0 %v1157
  %v1840 = vpop.f32.mrf.mxu0
  %v1841 = vadd.f32 %v1668, %v1840
  %v1842 = vpop.f32.mrf.mxu0
  %v1843 = vadd.f32 %v1670, %v1842
  %1844 = vmatmul.bf16.gmra.mxu0 %v1162
  %v1845 = vpop.f32.mrf.mxu0
  %v1846 = vadd.f32 %v1673, %v1845
  %v1847 = vpop.f32.mrf.mxu0
  %v1848 = vadd.f32 %v1675, %v1847
  %1849 = vmatmul.bf16.gmra.mxu0 %v1167
  %v1850 = vpop.f32.mrf.mxu0
  %v1851 = vadd.f32 %v1678, %v1850
  %v1852 = vpop.f32.mrf.mxu0
  %v1853 = vadd.f32 %v1680, %v1852
  %1854 = vmatmul.bf16.gmra.mxu0 %v1172
  %v1855 = vpop.f32.mrf.mxu0
  %v1856 = vadd.f32 %v1683, %v1855
  %v1857 = vpop.f32.mrf.mxu0
  %v1858 = vadd.f32 %v1685, %v1857
  %1859 = vmatmul.bf16.gmra.mxu0 %v1177
  %v1860 = vpop.f32.mrf.mxu0
  %v1861 = vadd.f32 %v1688, %v1860
  %v1862 = vpop.f32.mrf.mxu0
  %1863 = vdwg.mxu0
  %1864 = vmatpush.bf16.msra.mxu0 %v486
  %1865 = vmatpush.bf16.msra.mxu0 %v485
  %1866 = vmatpush.bf16.msra.mxu0 %v484
  %1867 = vmatpush.bf16.msra.mxu0 %v483
  %1868 = vmatpush.bf16.msra.mxu0 %v482
  %1869 = vmatpush.bf16.msra.mxu0 %v481
  %1870 = vmatpush.bf16.msra.mxu0 %v480
  %1871 = vmatpush.bf16.msra.mxu0 %v479
  %1872 = vmatmul.bf16.gmra.mxu0 %v1018
  %v1873 = vpop.f32.mrf.mxu0
  %v1874 = vadd.f32 %v1701, %v1873
  %v1875 = vpop.f32.mrf.mxu0
  %v1876 = vadd.f32 %v1703, %v1875
  %1877 = vmatmul.bf16.gmra.mxu0 %v1023
  %v1878 = vpop.f32.mrf.mxu0
  %v1879 = vadd.f32 %v1706, %v1878
  %v1880 = vpop.f32.mrf.mxu0
  %v1881 = vadd.f32 %v1708, %v1880
  %1882 = vmatmul.bf16.gmra.mxu0 %v1028
  %v1883 = vpop.f32.mrf.mxu0
  %v1884 = vadd.f32 %v1711, %v1883
  %v1885 = vpop.f32.mrf.mxu0
  %v1886 = vadd.f32 %v1713, %v1885
  %1887 = vmatmul.bf16.gmra.mxu0 %v1033
  %v1888 = vpop.f32.mrf.mxu0
  %v1889 = vadd.f32 %v1716, %v1888
  %v1890 = vpop.f32.mrf.mxu0
  %v1891 = vadd.f32 %v1718, %v1890
  %1892 = vmatmul.bf16.gmra.mxu0 %v1038
  %v1893 = vpop.f32.mrf.mxu0
  %v1894 = vadd.f32 %v1721, %v1893
  %v1895 = vpop.f32.mrf.mxu0
  %v1896 = vadd.f32 %v1723, %v1895
  %1897 = vmatmul.bf16.gmra.mxu0 %v1043
  %v1898 = vpop.f32.mrf.mxu0
  %v1899 = vadd.f32 %v1726, %v1898
  %v1900 = vpop.f32.mrf.mxu0
  %v1901 = vadd.f32 %v1728, %v1900
  %1902 = vmatmul.bf16.gmra.mxu0 %v1048
  %v1903 = vpop.f32.mrf.mxu0
  %v1904 = vadd.f32 %v1731, %v1903
  %v1905 = vpop.f32.mrf.mxu0
  %v1906 = vadd.f32 %v1733, %v1905
  %1907 = vmatmul.bf16.gmra.mxu0 %v1053
  %v1908 = vpop.f32.mrf.mxu0
  %v1909 = vadd.f32 %v1736, %v1908
  %v1910 = vpop.f32.mrf.mxu0
  %v1911 = vadd.f32 %v1738, %v1910
  %1912 = vmatmul.bf16.gmra.mxu0 %v1058
  %v1913 = vpop.f32.mrf.mxu0
  %v1914 = vadd.f32 %v1741, %v1913
  %v1915 = vpop.f32.mrf.mxu0
  %v1916 = vadd.f32 %v1743, %v1915
  %1917 = vmatmul.bf16.gmra.mxu0 %v1063
  %v1918 = vpop.f32.mrf.mxu0
  %v1919 = vadd.f32 %v1746, %v1918
  %v1920 = vpop.f32.mrf.mxu0
  %v1921 = vadd.f32 %v1748, %v1920
  %1922 = vmatmul.bf16.gmra.mxu0 %v1068
  %v1923 = vpop.f32.mrf.mxu0
  %v1924 = vadd.f32 %v1751, %v1923
  %v1925 = vpop.f32.mrf.mxu0
  %v1926 = vadd.f32 %v1753, %v1925
  %1927 = vmatmul.bf16.gmra.mxu0 %v1073
  %v1928 = vpop.f32.mrf.mxu0
  %v1929 = vadd.f32 %v1756, %v1928
  %v1930 = vpop.f32.mrf.mxu0
  %v1931 = vadd.f32 %v1758, %v1930
  %1932 = vmatmul.bf16.gmra.mxu0 %v1078
  %v1933 = vpop.f32.mrf.mxu0
  %v1934 = vadd.f32 %v1761, %v1933
  %v1935 = vpop.f32.mrf.mxu0
  %v1936 = vadd.f32 %v1763, %v1935
  %1937 = vmatmul.bf16.gmra.mxu0 %v1083
  %v1938 = vpop.f32.mrf.mxu0
  %v1939 = vadd.f32 %v1766, %v1938
  %v1940 = vpop.f32.mrf.mxu0
  %v1941 = vadd.f32 %v1768, %v1940
  %1942 = vmatmul.bf16.gmra.mxu0 %v1088
  %v1943 = vpop.f32.mrf.mxu0
  %v1944 = vadd.f32 %v1771, %v1943
  %v1945 = vpop.f32.mrf.mxu0
  %v1946 = vadd.f32 %v1773, %v1945
  %1947 = vmatmul.bf16.gmra.mxu0 %v1093
  %v1948 = vpop.f32.mrf.mxu0
  %v1949 = vadd.f32 %v1776, %v1948
  %v1950 = vpop.f32.mrf.mxu0
  %v1951 = vadd.f32 %v1778, %v1950
  %1952 = vmatmul.bf16.gmra.mxu0 %v1098
  %v1953 = vpop.f32.mrf.mxu0
  %v1954 = vadd.f32 %v1781, %v1953
  %v1955 = vpop.f32.mrf.mxu0
  %v1956 = vadd.f32 %v1783, %v1955
  %1957 = vmatmul.bf16.gmra.mxu0 %v1103
  %v1958 = vpop.f32.mrf.mxu0
  %v1959 = vadd.f32 %v1786, %v1958
  %v1960 = vpop.f32.mrf.mxu0
  %v1961 = vadd.f32 %v1788, %v1960
  %1962 = vmatmul.bf16.gmra.mxu0 %v1108
  %v1963 = vpop.f32.mrf.mxu0
  %v1964 = vadd.f32 %v1791, %v1963
  %v1965 = vpop.f32.mrf.mxu0
  %v1966 = vadd.f32 %v1793, %v1965
  %1967 = vmatmul.bf16.gmra.mxu0 %v1113
  %v1968 = vpop.f32.mrf.mxu0
  %v1969 = vadd.f32 %v1796, %v1968
  %v1970 = vpop.f32.mrf.mxu0
  %v1971 = vadd.f32 %v1798, %v1970
  %1972 = vmatmul.bf16.gmra.mxu0 %v1118
  %v1973 = vpop.f32.mrf.mxu0
  %v1974 = vadd.f32 %v1801, %v1973
  %v1975 = vpop.f32.mrf.mxu0
  %v1976 = vadd.f32 %v1803, %v1975
  %1977 = vmatmul.bf16.gmra.mxu0 %v1123
  %v1978 = vpop.f32.mrf.mxu0
  %v1979 = vadd.f32 %v1806, %v1978
  %v1980 = vpop.f32.mrf.mxu0
  %v1981 = vadd.f32 %v1808, %v1980
  %1982 = vmatmul.bf16.gmra.mxu0 %v1128
  %v1983 = vpop.f32.mrf.mxu0
  %v1984 = vadd.f32 %v1811, %v1983
  %v1985 = vpop.f32.mrf.mxu0
  %v1986 = vadd.f32 %v1813, %v1985
  %1987 = vmatmul.bf16.gmra.mxu0 %v1133
  %v1988 = vpop.f32.mrf.mxu0
  %v1989 = vadd.f32 %v1816, %v1988
  %v1990 = vpop.f32.mrf.mxu0
  %v1991 = vadd.f32 %v1818, %v1990
  %1992 = vmatmul.bf16.gmra.mxu0 %v1138
  %v1993 = vpop.f32.mrf.mxu0
  %v1994 = vadd.f32 %v1821, %v1993
  %v1995 = vpop.f32.mrf.mxu0
  %v1996 = vadd.f32 %v1823, %v1995
  %1997 = vmatmul.bf16.gmra.mxu0 %v1143
  %v1998 = vpop.f32.mrf.mxu0
  %v1999 = vadd.f32 %v1826, %v1998
  %v2000 = vpop.f32.mrf.mxu0
  %v2001 = vadd.f32 %v1828, %v2000
  %2002 = vmatmul.bf16.gmra.mxu0 %v1148
  %v2003 = vpop.f32.mrf.mxu0
  %v2004 = vadd.f32 %v1831, %v2003
  %v2005 = vpop.f32.mrf.mxu0
  %v2006 = vadd.f32 %v1833, %v2005
  %2007 = vmatmul.bf16.gmra.mxu0 %v1153
  %v2008 = vpop.f32.mrf.mxu0
  %v2009 = vadd.f32 %v1836, %v2008
  %v2010 = vpop.f32.mrf.mxu0
  %v2011 = vadd.f32 %v1838, %v2010
  %2012 = vmatmul.bf16.gmra.mxu0 %v1158
  %v2013 = vpop.f32.mrf.mxu0
  %v2014 = vadd.f32 %v1841, %v2013
  %v2015 = vpop.f32.mrf.mxu0
  %v2016 = vadd.f32 %v1843, %v2015
  %2017 = vmatmul.bf16.gmra.mxu0 %v1163
  %v2018 = vpop.f32.mrf.mxu0
  %v2019 = vadd.f32 %v1846, %v2018
  %v2020 = vpop.f32.mrf.mxu0
  %v2021 = vadd.f32 %v1848, %v2020
  %2022 = vmatmul.bf16.gmra.mxu0 %v1168
  %v2023 = vpop.f32.mrf.mxu0
  %v2024 = vadd.f32 %v1851, %v2023
  %v2025 = vpop.f32.mrf.mxu0
  %v2026 = vadd.f32 %v1853, %v2025
  %2027 = vmatmul.bf16.gmra.mxu0 %v1173
  %v2028 = vpop.f32.mrf.mxu0
  %v2029 = vadd.f32 %v1856, %v2028
  %v2030 = vpop.f32.mrf.mxu0
  %v2031 = vadd.f32 %v1858, %v2030
  %2032 = vmatmul.bf16.gmra.mxu0 %v1178
  %v2033 = vpop.f32.mrf.mxu0
  %v2034 = vadd.f32 %v1861, %v2033
  %v2035 = vpop.f32.mrf.mxu0
  %2036 = vdwg.mxu0
  %2037 = vmatpush.bf16.msra.mxu0 %v494
  %2038 = vmatpush.bf16.msra.mxu0 %v493
  %2039 = vmatpush.bf16.msra.mxu0 %v492
  %2040 = vmatpush.bf16.msra.mxu0 %v491
  %2041 = vmatpush.bf16.msra.mxu0 %v490
  %2042 = vmatpush.bf16.msra.mxu0 %v489
  %2043 = vmatpush.bf16.msra.mxu0 %v488
  %2044 = vmatpush.bf16.msra.mxu0 %v487
  %2045 = vmatmul.bf16.gmra.mxu0 %v1019
  %v2046 = vpop.f32.mrf.mxu0
  %v2047 = vadd.f32 %v1874, %v2046
  %v2048 = vpop.f32.mrf.mxu0
  %v2049 = vadd.f32 %v1876, %v2048
  %2050 = vmatmul.bf16.gmra.mxu0 %v1024
  %v2051 = vpop.f32.mrf.mxu0
  %v2052 = vadd.f32 %v1879, %v2051
  %v2053 = vpop.f32.mrf.mxu0
  %v2054 = vadd.f32 %v1881, %v2053
  %2055 = vmatmul.bf16.gmra.mxu0 %v1029
  %v2056 = vpop.f32.mrf.mxu0
  %v2057 = vadd.f32 %v1884, %v2056
  %v2058 = vpop.f32.mrf.mxu0
  %v2059 = vadd.f32 %v1886, %v2058
  %2060 = vmatmul.bf16.gmra.mxu0 %v1034
  %v2061 = vpop.f32.mrf.mxu0
  %v2062 = vadd.f32 %v1889, %v2061
  %v2063 = vpop.f32.mrf.mxu0
  %v2064 = vadd.f32 %v1891, %v2063
  %2065 = vmatmul.bf16.gmra.mxu0 %v1039
  %v2066 = vpop.f32.mrf.mxu0
  %v2067 = vadd.f32 %v1894, %v2066
  %v2068 = vpop.f32.mrf.mxu0
  %v2069 = vadd.f32 %v1896, %v2068
  %2070 = vmatmul.bf16.gmra.mxu0 %v1044
  %v2071 = vpop.f32.mrf.mxu0
  %v2072 = vadd.f32 %v1899, %v2071
  %v2073 = vpop.f32.mrf.mxu0
  %v2074 = vadd.f32 %v1901, %v2073
  %2075 = vmatmul.bf16.gmra.mxu0 %v1049
  %v2076 = vpop.f32.mrf.mxu0
  %v2077 = vadd.f32 %v1904, %v2076
  %v2078 = vpop.f32.mrf.mxu0
  %v2079 = vadd.f32 %v1906, %v2078
  %2080 = vmatmul.bf16.gmra.mxu0 %v1054
  %v2081 = vpop.f32.mrf.mxu0
  %v2082 = vadd.f32 %v1909, %v2081
  %v2083 = vpop.f32.mrf.mxu0
  %v2084 = vadd.f32 %v1911, %v2083
  %2085 = vmatmul.bf16.gmra.mxu0 %v1059
  %v2086 = vpop.f32.mrf.mxu0
  %v2087 = vadd.f32 %v1914, %v2086
  %v2088 = vpop.f32.mrf.mxu0
  %v2089 = vadd.f32 %v1916, %v2088
  %2090 = vmatmul.bf16.gmra.mxu0 %v1064
  %v2091 = vpop.f32.mrf.mxu0
  %v2092 = vadd.f32 %v1919, %v2091
  %v2093 = vpop.f32.mrf.mxu0
  %v2094 = vadd.f32 %v1921, %v2093
  %2095 = vmatmul.bf16.gmra.mxu0 %v1069
  %v2096 = vpop.f32.mrf.mxu0
  %v2097 = vadd.f32 %v1924, %v2096
  %v2098 = vpop.f32.mrf.mxu0
  %v2099 = vadd.f32 %v1926, %v2098
  %2100 = vmatmul.bf16.gmra.mxu0 %v1074
  %v2101 = vpop.f32.mrf.mxu0
  %v2102 = vadd.f32 %v1929, %v2101
  %v2103 = vpop.f32.mrf.mxu0
  %v2104 = vadd.f32 %v1931, %v2103
  %2105 = vmatmul.bf16.gmra.mxu0 %v1079
  %v2106 = vpop.f32.mrf.mxu0
  %v2107 = vadd.f32 %v1934, %v2106
  %v2108 = vpop.f32.mrf.mxu0
  %v2109 = vadd.f32 %v1936, %v2108
  %2110 = vmatmul.bf16.gmra.mxu0 %v1084
  %v2111 = vpop.f32.mrf.mxu0
  %v2112 = vadd.f32 %v1939, %v2111
  %v2113 = vpop.f32.mrf.mxu0
  %v2114 = vadd.f32 %v1941, %v2113
  %2115 = vmatmul.bf16.gmra.mxu0 %v1089
  %v2116 = vpop.f32.mrf.mxu0
  %v2117 = vadd.f32 %v1944, %v2116
  %v2118 = vpop.f32.mrf.mxu0
  %v2119 = vadd.f32 %v1946, %v2118
  %2120 = vmatmul.bf16.gmra.mxu0 %v1094
  %v2121 = vpop.f32.mrf.mxu0
  %v2122 = vadd.f32 %v1949, %v2121
  %v2123 = vpop.f32.mrf.mxu0
  %v2124 = vadd.f32 %v1951, %v2123
  %2125 = vmatmul.bf16.gmra.mxu0 %v1099
  %v2126 = vpop.f32.mrf.mxu0
  %v2127 = vadd.f32 %v1954, %v2126
  %v2128 = vpop.f32.mrf.mxu0
  %v2129 = vadd.f32 %v1956, %v2128
  %2130 = vmatmul.bf16.gmra.mxu0 %v1104
  %v2131 = vpop.f32.mrf.mxu0
  %v2132 = vadd.f32 %v1959, %v2131
  %v2133 = vpop.f32.mrf.mxu0
  %v2134 = vadd.f32 %v1961, %v2133
  %2135 = vmatmul.bf16.gmra.mxu0 %v1109
  %v2136 = vpop.f32.mrf.mxu0
  %v2137 = vadd.f32 %v1964, %v2136
  %v2138 = vpop.f32.mrf.mxu0
  %v2139 = vadd.f32 %v1966, %v2138
  %2140 = vmatmul.bf16.gmra.mxu0 %v1114
  %v2141 = vpop.f32.mrf.mxu0
  %v2142 = vadd.f32 %v1969, %v2141
  %v2143 = vpop.f32.mrf.mxu0
  %v2144 = vadd.f32 %v1971, %v2143
  %2145 = vmatmul.bf16.gmra.mxu0 %v1119
  %v2146 = vpop.f32.mrf.mxu0
  %v2147 = vadd.f32 %v1974, %v2146
  %v2148 = vpop.f32.mrf.mxu0
  %v2149 = vadd.f32 %v1976, %v2148
  %2150 = vmatmul.bf16.gmra.mxu0 %v1124
  %v2151 = vpop.f32.mrf.mxu0
  %v2152 = vadd.f32 %v1979, %v2151
  %v2153 = vpop.f32.mrf.mxu0
  %v2154 = vadd.f32 %v1981, %v2153
  %2155 = vmatmul.bf16.gmra.mxu0 %v1129
  %v2156 = vpop.f32.mrf.mxu0
  %v2157 = vadd.f32 %v1984, %v2156
  %v2158 = vpop.f32.mrf.mxu0
  %v2159 = vadd.f32 %v1986, %v2158
  %2160 = vmatmul.bf16.gmra.mxu0 %v1134
  %v2161 = vpop.f32.mrf.mxu0
  %v2162 = vadd.f32 %v1989, %v2161
  %v2163 = vpop.f32.mrf.mxu0
  %v2164 = vadd.f32 %v1991, %v2163
  %2165 = vmatmul.bf16.gmra.mxu0 %v1139
  %v2166 = vpop.f32.mrf.mxu0
  %v2167 = vadd.f32 %v1994, %v2166
  %v2168 = vpop.f32.mrf.mxu0
  %v2169 = vadd.f32 %v1996, %v2168
  %2170 = vmatmul.bf16.gmra.mxu0 %v1144
  %v2171 = vpop.f32.mrf.mxu0
  %v2172 = vadd.f32 %v1999, %v2171
  %v2173 = vpop.f32.mrf.mxu0
  %v2174 = vadd.f32 %v2001, %v2173
  %2175 = vmatmul.bf16.gmra.mxu0 %v1149
  %v2176 = vpop.f32.mrf.mxu0
  %v2177 = vadd.f32 %v2004, %v2176
  %v2178 = vpop.f32.mrf.mxu0
  %v2179 = vadd.f32 %v2006, %v2178
  %2180 = vmatmul.bf16.gmra.mxu0 %v1154
  %v2181 = vpop.f32.mrf.mxu0
  %v2182 = vadd.f32 %v2009, %v2181
  %v2183 = vpop.f32.mrf.mxu0
  %v2184 = vadd.f32 %v2011, %v2183
  %2185 = vmatmul.bf16.gmra.mxu0 %v1159
  %v2186 = vpop.f32.mrf.mxu0
  %v2187 = vadd.f32 %v2014, %v2186
  %v2188 = vpop.f32.mrf.mxu0
  %v2189 = vadd.f32 %v2016, %v2188
  %2190 = vmatmul.bf16.gmra.mxu0 %v1164
  %v2191 = vpop.f32.mrf.mxu0
  %v2192 = vadd.f32 %v2019, %v2191
  %v2193 = vpop.f32.mrf.mxu0
  %v2194 = vadd.f32 %v2021, %v2193
  %2195 = vmatmul.bf16.gmra.mxu0 %v1169
  %v2196 = vpop.f32.mrf.mxu0
  %v2197 = vadd.f32 %v2024, %v2196
  %v2198 = vpop.f32.mrf.mxu0
  %v2199 = vadd.f32 %v2026, %v2198
  %2200 = vmatmul.bf16.gmra.mxu0 %v1174
  %v2201 = vpop.f32.mrf.mxu0
  %v2202 = vadd.f32 %v2029, %v2201
  %v2203 = vpop.f32.mrf.mxu0
  %v2204 = vadd.f32 %v2031, %v2203
  %2205 = vmatmul.bf16.gmra.mxu0 %v1179
  %v2206 = vpop.f32.mrf.mxu0
  %v2207 = vadd.f32 %v2034, %v2206
  %v2208 = vpop.f32.mrf.mxu0
  %2209 = vdwg.mxu0
  %v2210 = vld [vmem:[%s3] sm:$0xf]
  %v2211 = vld [vmem:[%s4] sm:$0x1]
  %v2213 = vperm.slane %v2211, 0
  %vm2215 = vcmask 31744
  %v2217 = vsel %vm2215, %v2047, 0
  %v2220 = vsel %vm2215, %v2049, 0
  %v2223 = vsel %vm2215, %v2052, 0
  %v2226 = vsel %vm2215, %v2054, 0
  %v2229 = vsel %vm2215, %v2057, 0
  %v2232 = vsel %vm2215, %v2059, 0
  %v2235 = vsel %vm2215, %v2062, 0
  %v2238 = vsel %vm2215, %v2064, 0
  %v2241 = vsel %vm2215, %v2067, 0
  %v2244 = vsel %vm2215, %v2069, 0
  %v2247 = vsel %vm2215, %v2072, 0
  %v2250 = vsel %vm2215, %v2074, 0
  %v2253 = vsel %vm2215, %v2077, 0
  %v2256 = vsel %vm2215, %v2079, 0
  %v2259 = vsel %vm2215, %v2082, 0
  %v2262 = vsel %vm2215, %v2084, 0
  %v2265 = vsel %vm2215, %v2087, 0
  %v2268 = vsel %vm2215, %v2089, 0
  %v2271 = vsel %vm2215, %v2092, 0
  %v2274 = vsel %vm2215, %v2094, 0
  %v2277 = vsel %vm2215, %v2097, 0
  %v2280 = vsel %vm2215, %v2099, 0
  %v2283 = vsel %vm2215, %v2102, 0
  %v2286 = vsel %vm2215, %v2104, 0
  %v2289 = vsel %vm2215, %v2107, 0
  %v2292 = vsel %vm2215, %v2109, 0
  %v2295 = vsel %vm2215, %v2112, 0
  %v2298 = vsel %vm2215, %v2114, 0
  %v2301 = vsel %vm2215, %v2117, 0
  %v2304 = vsel %vm2215, %v2119, 0
  %v2307 = vsel %vm2215, %v2122, 0
  %v2310 = vsel %vm2215, %v2124, 0
  %v2313 = vsel %vm2215, %v2127, 0
  %v2316 = vsel %vm2215, %v2129, 0
  %v2319 = vsel %vm2215, %v2132, 0
  %v2322 = vsel %vm2215, %v2134, 0
  %v2325 = vsel %vm2215, %v2137, 0
  %v2328 = vsel %vm2215, %v2139, 0
  %v2331 = vsel %vm2215, %v2142, 0
  %v2334 = vsel %vm2215, %v2144, 0
  %v2337 = vsel %vm2215, %v2147, 0
  %v2340 = vsel %vm2215, %v2149, 0
  %v2343 = vsel %vm2215, %v2152, 0
  %v2346 = vsel %vm2215, %v2154, 0
  %v2349 = vsel %vm2215, %v2157, 0
  %v2352 = vsel %vm2215, %v2159, 0
  %v2355 = vsel %vm2215, %v2162, 0
  %v2358 = vsel %vm2215, %v2164, 0
  %v2361 = vsel %vm2215, %v2167, 0
  %v2364 = vsel %vm2215, %v2169, 0
  %v2367 = vsel %vm2215, %v2172, 0
  %v2370 = vsel %vm2215, %v2174, 0
  %v2373 = vsel %vm2215, %v2177, 0
  %v2376 = vsel %vm2215, %v2179, 0
  %v2379 = vsel %vm2215, %v2182, 0
  %v2382 = vsel %vm2215, %v2184, 0
  %v2385 = vsel %vm2215, %v2187, 0
  %v2388 = vsel %vm2215, %v2189, 0
  %v2391 = vsel %vm2215, %v2192, 0
  %v2394 = vsel %vm2215, %v2194, 0
  %v2397 = vsel %vm2215, %v2197, 0
  %v2400 = vsel %vm2215, %v2199, 0
  %v2403 = vsel %vm2215, %v2202, 0
  %v2406 = vsel %vm2215, %v2204, 0
  %v2409 = vsel %vm2215, %v2207, 0
  %vm2411 = vcmask 1043456
  %v2413 = vsel %vm2411, %v2210, 0
  %2415 = vmatpush.msra.mxu0 0.0
  %2416 = vmatpush.msra.mxu0 0.0
  %2417 = vmatpush.msra.mxu0 0.0
  %2418 = vmatpush.msra.mxu0 0.0
  %2419 = vmatpush.msra.mxu0 0.0
  %2420 = vmatpush.msra.mxu0 0.0
  %2421 = vmatpush.msra.mxu0 0.0
  %2422 = vmatpush.msra.mxu0 0.0
  %2423 = vmatpush.msra.mxu0 0.0
  %2424 = vmatpush.msra.mxu0 0.0
  %2425 = vmatpush.msra.mxu0 0.0
  %2426 = vmatpush.msra.mxu0 0.0
  %2427 = vmatpush.msra.mxu0 0.0
  %2428 = vmatpush.msra.mxu0 0.0
  %2429 = vmatpush.msra.mxu0 0.0
  %2430 = vmatpush.msra.mxu0 %v2413
  %2431 = vmatmul.f32.gmra.mxu0 %v2217
  %v2432 = vpop.f32.mrf.mxu0
  %v2433 = vadd.f32 %v2213, %v2432
  %2434 = vmatmul.f32.gmra.mxu0 %v2220
  %v2435 = vpop.f32.mrf.mxu0
  %v2436 = vadd.f32 %v2213, %v2435
  %2437 = vmatmul.f32.gmra.mxu0 %v2223
  %v2438 = vpop.f32.mrf.mxu0
  %v2439 = vadd.f32 %v2213, %v2438
  %2440 = vmatmul.f32.gmra.mxu0 %v2226
  %v2441 = vpop.f32.mrf.mxu0
  %v2442 = vadd.f32 %v2213, %v2441
  %2443 = vmatmul.f32.gmra.mxu0 %v2229
  %v2444 = vpop.f32.mrf.mxu0
  %v2445 = vadd.f32 %v2213, %v2444
  %2446 = vmatmul.f32.gmra.mxu0 %v2232
  %v2447 = vpop.f32.mrf.mxu0
  %v2448 = vadd.f32 %v2213, %v2447
  %2449 = vmatmul.f32.gmra.mxu0 %v2235
  %v2450 = vpop.f32.mrf.mxu0
  %v2451 = vadd.f32 %v2213, %v2450
  %2452 = vmatmul.f32.gmra.mxu0 %v2238
  %v2453 = vpop.f32.mrf.mxu0
  %v2454 = vadd.f32 %v2213, %v2453
  %2455 = vmatmul.f32.gmra.mxu0 %v2241
  %v2456 = vpop.f32.mrf.mxu0
  %v2457 = vadd.f32 %v2213, %v2456
  %2458 = vmatmul.f32.gmra.mxu0 %v2244
  %v2459 = vpop.f32.mrf.mxu0
  %v2460 = vadd.f32 %v2213, %v2459
  %2461 = vmatmul.f32.gmra.mxu0 %v2247
  %v2462 = vpop.f32.mrf.mxu0
  %v2463 = vadd.f32 %v2213, %v2462
  %2464 = vmatmul.f32.gmra.mxu0 %v2250
  %v2465 = vpop.f32.mrf.mxu0
  %v2466 = vadd.f32 %v2213, %v2465
  %2467 = vmatmul.f32.gmra.mxu0 %v2253
  %v2468 = vpop.f32.mrf.mxu0
  %v2469 = vadd.f32 %v2213, %v2468
  %2470 = vmatmul.f32.gmra.mxu0 %v2256
  %v2471 = vpop.f32.mrf.mxu0
  %v2472 = vadd.f32 %v2213, %v2471
  %2473 = vmatmul.f32.gmra.mxu0 %v2259
  %v2474 = vpop.f32.mrf.mxu0
  %v2475 = vadd.f32 %v2213, %v2474
  %2476 = vmatmul.f32.gmra.mxu0 %v2262
  %v2477 = vpop.f32.mrf.mxu0
  %v2478 = vadd.f32 %v2213, %v2477
  %2479 = vmatmul.f32.gmra.mxu0 %v2265
  %v2480 = vpop.f32.mrf.mxu0
  %v2481 = vadd.f32 %v2213, %v2480
  %2482 = vmatmul.f32.gmra.mxu0 %v2268
  %v2483 = vpop.f32.mrf.mxu0
  %v2484 = vadd.f32 %v2213, %v2483
  %2485 = vmatmul.f32.gmra.mxu0 %v2271
  %v2486 = vpop.f32.mrf.mxu0
  %v2487 = vadd.f32 %v2213, %v2486
  %2488 = vmatmul.f32.gmra.mxu0 %v2274
  %v2489 = vpop.f32.mrf.mxu0
  %v2490 = vadd.f32 %v2213, %v2489
  %2491 = vmatmul.f32.gmra.mxu0 %v2277
  %v2492 = vpop.f32.mrf.mxu0
  %v2493 = vadd.f32 %v2213, %v2492
  %2494 = vmatmul.f32.gmra.mxu0 %v2280
  %v2495 = vpop.f32.mrf.mxu0
  %v2496 = vadd.f32 %v2213, %v2495
  %2497 = vmatmul.f32.gmra.mxu0 %v2283
  %v2498 = vpop.f32.mrf.mxu0
  %v2499 = vadd.f32 %v2213, %v2498
  %2500 = vmatmul.f32.gmra.mxu0 %v2286
  %v2501 = vpop.f32.mrf.mxu0
  %v2502 = vadd.f32 %v2213, %v2501
  %2503 = vmatmul.f32.gmra.mxu0 %v2289
  %v2504 = vpop.f32.mrf.mxu0
  %v2505 = vadd.f32 %v2213, %v2504
  %2506 = vmatmul.f32.gmra.mxu0 %v2292
  %v2507 = vpop.f32.mrf.mxu0
  %v2508 = vadd.f32 %v2213, %v2507
  %2509 = vmatmul.f32.gmra.mxu0 %v2295
  %v2510 = vpop.f32.mrf.mxu0
  %v2511 = vadd.f32 %v2213, %v2510
  %2512 = vmatmul.f32.gmra.mxu0 %v2298
  %v2513 = vpop.f32.mrf.mxu0
  %v2514 = vadd.f32 %v2213, %v2513
  %2515 = vmatmul.f32.gmra.mxu0 %v2301
  %v2516 = vpop.f32.mrf.mxu0
  %v2517 = vadd.f32 %v2213, %v2516
  %2518 = vmatmul.f32.gmra.mxu0 %v2304
  %v2519 = vpop.f32.mrf.mxu0
  %v2520 = vadd.f32 %v2213, %v2519
  %2521 = vmatmul.f32.gmra.mxu0 %v2307
  %v2522 = vpop.f32.mrf.mxu0
  %v2523 = vadd.f32 %v2213, %v2522
  %2524 = vmatmul.f32.gmra.mxu0 %v2310
  %v2525 = vpop.f32.mrf.mxu0
  %v2526 = vadd.f32 %v2213, %v2525
  %2527 = vmatmul.f32.gmra.mxu0 %v2313
  %v2528 = vpop.f32.mrf.mxu0
  %v2529 = vadd.f32 %v2213, %v2528
  %2530 = vmatmul.f32.gmra.mxu0 %v2316
  %v2531 = vpop.f32.mrf.mxu0
  %v2532 = vadd.f32 %v2213, %v2531
  %2533 = vmatmul.f32.gmra.mxu0 %v2319
  %v2534 = vpop.f32.mrf.mxu0
  %v2535 = vadd.f32 %v2213, %v2534
  %2536 = vmatmul.f32.gmra.mxu0 %v2322
  %v2537 = vpop.f32.mrf.mxu0
  %v2538 = vadd.f32 %v2213, %v2537
  %2539 = vmatmul.f32.gmra.mxu0 %v2325
  %v2540 = vpop.f32.mrf.mxu0
  %v2541 = vadd.f32 %v2213, %v2540
  %2542 = vmatmul.f32.gmra.mxu0 %v2328
  %v2543 = vpop.f32.mrf.mxu0
  %v2544 = vadd.f32 %v2213, %v2543
  %2545 = vmatmul.f32.gmra.mxu0 %v2331
  %v2546 = vpop.f32.mrf.mxu0
  %v2547 = vadd.f32 %v2213, %v2546
  %2548 = vmatmul.f32.gmra.mxu0 %v2334
  %v2549 = vpop.f32.mrf.mxu0
  %v2550 = vadd.f32 %v2213, %v2549
  %2551 = vmatmul.f32.gmra.mxu0 %v2337
  %v2552 = vpop.f32.mrf.mxu0
  %v2553 = vadd.f32 %v2213, %v2552
  %2554 = vmatmul.f32.gmra.mxu0 %v2340
  %v2555 = vpop.f32.mrf.mxu0
  %v2556 = vadd.f32 %v2213, %v2555
  %2557 = vmatmul.f32.gmra.mxu0 %v2343
  %v2558 = vpop.f32.mrf.mxu0
  %v2559 = vadd.f32 %v2213, %v2558
  %2560 = vmatmul.f32.gmra.mxu0 %v2346
  %v2561 = vpop.f32.mrf.mxu0
  %v2562 = vadd.f32 %v2213, %v2561
  %2563 = vmatmul.f32.gmra.mxu0 %v2349
  %v2564 = vpop.f32.mrf.mxu0
  %v2565 = vadd.f32 %v2213, %v2564
  %2566 = vmatmul.f32.gmra.mxu0 %v2352
  %v2567 = vpop.f32.mrf.mxu0
  %v2568 = vadd.f32 %v2213, %v2567
  %2569 = vmatmul.f32.gmra.mxu0 %v2355
  %v2570 = vpop.f32.mrf.mxu0
  %v2571 = vadd.f32 %v2213, %v2570
  %2572 = vmatmul.f32.gmra.mxu0 %v2358
  %v2573 = vpop.f32.mrf.mxu0
  %v2574 = vadd.f32 %v2213, %v2573
  %2575 = vmatmul.f32.gmra.mxu0 %v2361
  %v2576 = vpop.f32.mrf.mxu0
  %v2577 = vadd.f32 %v2213, %v2576
  %2578 = vmatmul.f32.gmra.mxu0 %v2364
  %v2579 = vpop.f32.mrf.mxu0
  %v2580 = vadd.f32 %v2213, %v2579
  %2581 = vmatmul.f32.gmra.mxu0 %v2367
  %v2582 = vpop.f32.mrf.mxu0
  %v2583 = vadd.f32 %v2213, %v2582
  %2584 = vmatmul.f32.gmra.mxu0 %v2370
  %v2585 = vpop.f32.mrf.mxu0
  %v2586 = vadd.f32 %v2213, %v2585
  %2587 = vmatmul.f32.gmra.mxu0 %v2373
  %v2588 = vpop.f32.mrf.mxu0
  %v2589 = vadd.f32 %v2213, %v2588
  %2590 = vmatmul.f32.gmra.mxu0 %v2376
  %v2591 = vpop.f32.mrf.mxu0
  %v2592 = vadd.f32 %v2213, %v2591
  %2593 = vmatmul.f32.gmra.mxu0 %v2379
  %v2594 = vpop.f32.mrf.mxu0
  %v2595 = vadd.f32 %v2213, %v2594
  %2596 = vmatmul.f32.gmra.mxu0 %v2382
  %v2597 = vpop.f32.mrf.mxu0
  %v2598 = vadd.f32 %v2213, %v2597
  %2599 = vmatmul.f32.gmra.mxu0 %v2385
  %v2600 = vpop.f32.mrf.mxu0
  %v2601 = vadd.f32 %v2213, %v2600
  %2602 = vmatmul.f32.gmra.mxu0 %v2388
  %v2603 = vpop.f32.mrf.mxu0
  %v2604 = vadd.f32 %v2213, %v2603
  %2605 = vmatmul.f32.gmra.mxu0 %v2391
  %v2606 = vpop.f32.mrf.mxu0
  %v2607 = vadd.f32 %v2213, %v2606
  %2608 = vmatmul.f32.gmra.mxu0 %v2394
  %v2609 = vpop.f32.mrf.mxu0
  %v2610 = vadd.f32 %v2213, %v2609
  %2611 = vmatmul.f32.gmra.mxu0 %v2397
  %v2612 = vpop.f32.mrf.mxu0
  %v2613 = vadd.f32 %v2213, %v2612
  %2614 = vmatmul.f32.gmra.mxu0 %v2400
  %v2615 = vpop.f32.mrf.mxu0
  %v2616 = vadd.f32 %v2213, %v2615
  %2617 = vmatmul.f32.gmra.mxu0 %v2403
  %v2618 = vpop.f32.mrf.mxu0
  %v2619 = vadd.f32 %v2213, %v2618
  %2620 = vmatmul.f32.gmra.mxu0 %v2406
  %v2621 = vpop.f32.mrf.mxu0
  %v2622 = vadd.f32 %v2213, %v2621
  %2623 = vmatmul.f32.gmra.mxu0 %v2409
  %v2624 = vpop.f32.mrf.mxu0
  %v2625 = vadd.f32 %v2213, %v2624
  %2626 = vdwg.mxu0
  %v2627 = vmax.f32 %v2433, 0.0
  %v2628 = vmax.f32 %v2436, 0.0
  %v2629 = vmax.f32 %v2439, 0.0
  %v2630 = vmax.f32 %v2442, 0.0
  %v2631 = vmax.f32 %v2445, 0.0
  %v2632 = vmax.f32 %v2448, 0.0
  %v2633 = vmax.f32 %v2451, 0.0
  %v2634 = vmax.f32 %v2454, 0.0
  %v2635 = vmax.f32 %v2457, 0.0
  %v2636 = vmax.f32 %v2460, 0.0
  %v2637 = vmax.f32 %v2463, 0.0
  %v2638 = vmax.f32 %v2466, 0.0
  %v2639 = vmax.f32 %v2469, 0.0
  %v2640 = vmax.f32 %v2472, 0.0
  %v2641 = vmax.f32 %v2475, 0.0
  %v2642 = vmax.f32 %v2478, 0.0
  %v2643 = vmax.f32 %v2481, 0.0
  %v2644 = vmax.f32 %v2484, 0.0
  %v2645 = vmax.f32 %v2487, 0.0
  %v2646 = vmax.f32 %v2490, 0.0
  %v2647 = vmax.f32 %v2493, 0.0
  %v2648 = vmax.f32 %v2496, 0.0
  %v2649 = vmax.f32 %v2499, 0.0
  %v2650 = vmax.f32 %v2502, 0.0
  %v2651 = vmax.f32 %v2505, 0.0
  %v2652 = vmax.f32 %v2508, 0.0
  %v2653 = vmax.f32 %v2511, 0.0
  %v2654 = vmax.f32 %v2514, 0.0
  %v2655 = vmax.f32 %v2517, 0.0
  %v2656 = vmax.f32 %v2520, 0.0
  %v2657 = vmax.f32 %v2523, 0.0
  %v2658 = vmax.f32 %v2526, 0.0
  %v2659 = vmax.f32 %v2529, 0.0
  %v2660 = vmax.f32 %v2532, 0.0
  %v2661 = vmax.f32 %v2535, 0.0
  %v2662 = vmax.f32 %v2538, 0.0
  %v2663 = vmax.f32 %v2541, 0.0
  %v2664 = vmax.f32 %v2544, 0.0
  %v2665 = vmax.f32 %v2547, 0.0
  %v2666 = vmax.f32 %v2550, 0.0
  %v2667 = vmax.f32 %v2553, 0.0
  %v2668 = vmax.f32 %v2556, 0.0
  %v2669 = vmax.f32 %v2559, 0.0
  %v2670 = vmax.f32 %v2562, 0.0
  %v2671 = vmax.f32 %v2565, 0.0
  %v2672 = vmax.f32 %v2568, 0.0
  %v2673 = vmax.f32 %v2571, 0.0
  %v2674 = vmax.f32 %v2574, 0.0
  %v2675 = vmax.f32 %v2577, 0.0
  %v2676 = vmax.f32 %v2580, 0.0
  %v2677 = vmax.f32 %v2583, 0.0
  %v2678 = vmax.f32 %v2586, 0.0
  %v2679 = vmax.f32 %v2589, 0.0
  %v2680 = vmax.f32 %v2592, 0.0
  %v2681 = vmax.f32 %v2595, 0.0
  %v2682 = vmax.f32 %v2598, 0.0
  %v2683 = vmax.f32 %v2601, 0.0
  %v2684 = vmax.f32 %v2604, 0.0
  %v2685 = vmax.f32 %v2607, 0.0
  %v2686 = vmax.f32 %v2610, 0.0
  %v2687 = vmax.f32 %v2613, 0.0
  %v2688 = vmax.f32 %v2616, 0.0
  %v2689 = vmax.f32 %v2619, 0.0
  %v2690 = vmax.f32 %v2622, 0.0
  %v2691 = vmax.f32 %v2625, 0.0
  %vm2692 = vcmask 64512
  %2693 = vst.msk [vmem:[%s5] sm:$0xff] %vm2692, %v2627
  %2694 = vst.msk [vmem:[%s5 + $0x8] sm:$0xff] %vm2692, %v2628
  %2695 = vst.msk [vmem:[%s5 + $0x10] sm:$0xff] %vm2692, %v2629
  %2696 = vst.msk [vmem:[%s5 + $0x18] sm:$0xff] %vm2692, %v2630
  %2697 = vst.msk [vmem:[%s5 + $0x20] sm:$0xff] %vm2692, %v2631
  %2698 = vst.msk [vmem:[%s5 + $0x28] sm:$0xff] %vm2692, %v2632
  %2699 = vst.msk [vmem:[%s5 + $0x30] sm:$0xff] %vm2692, %v2633
  %2700 = vst.msk [vmem:[%s5 + $0x38] sm:$0xff] %vm2692, %v2634
  %2701 = vst.msk [vmem:[%s5 + $0x40] sm:$0xff] %vm2692, %v2635
  %2702 = vst.msk [vmem:[%s5 + $0x48] sm:$0xff] %vm2692, %v2636
  %2703 = vst.msk [vmem:[%s5 + $0x50] sm:$0xff] %vm2692, %v2637
  %2704 = vst.msk [vmem:[%s5 + $0x58] sm:$0xff] %vm2692, %v2638
  %2705 = vst.msk [vmem:[%s5 + $0x60] sm:$0xff] %vm2692, %v2639
  %2706 = vst.msk [vmem:[%s5 + $0x68] sm:$0xff] %vm2692, %v2640
  %2707 = vst.msk [vmem:[%s5 + $0x70] sm:$0xff] %vm2692, %v2641
  %2708 = vst.msk [vmem:[%s5 + $0x78] sm:$0xff] %vm2692, %v2642
  %2709 = vst.msk [vmem:[%s5 + $0x80] sm:$0xff] %vm2692, %v2643
  %2710 = vst.msk [vmem:[%s5 + $0x88] sm:$0xff] %vm2692, %v2644
  %2711 = vst.msk [vmem:[%s5 + $0x90] sm:$0xff] %vm2692, %v2645
  %2712 = vst.msk [vmem:[%s5 + $0x98] sm:$0xff] %vm2692, %v2646
  %2713 = vst.msk [vmem:[%s5 + $0xa0] sm:$0xff] %vm2692, %v2647
  %2714 = vst.msk [vmem:[%s5 + $0xa8] sm:$0xff] %vm2692, %v2648
  %2715 = vst.msk [vmem:[%s5 + $0xb0] sm:$0xff] %vm2692, %v2649
  %2716 = vst.msk [vmem:[%s5 + $0xb8] sm:$0xff] %vm2692, %v2650
  %2717 = vst.msk [vmem:[%s5 + $0xc0] sm:$0xff] %vm2692, %v2651
  %2718 = vst.msk [vmem:[%s5 + $0xc8] sm:$0xff] %vm2692, %v2652
  %2719 = vst.msk [vmem:[%s5 + $0xd0] sm:$0xff] %vm2692, %v2653
  %2720 = vst.msk [vmem:[%s5 + $0xd8] sm:$0xff] %vm2692, %v2654
  %2721 = vst.msk [vmem:[%s5 + $0xe0] sm:$0xff] %vm2692, %v2655
  %2722 = vst.msk [vmem:[%s5 + $0xe8] sm:$0xff] %vm2692, %v2656
  %2723 = vst.msk [vmem:[%s5 + $0xf0] sm:$0xff] %vm2692, %v2657
  %2724 = vst.msk [vmem:[%s5 + $0xf8] sm:$0xff] %vm2692, %v2658
  %2725 = vst.msk [vmem:[%s5 + $0x100] sm:$0xff] %vm2692, %v2659
  %2726 = vst.msk [vmem:[%s5 + $0x108] sm:$0xff] %vm2692, %v2660
  %2727 = vst.msk [vmem:[%s5 + $0x110] sm:$0xff] %vm2692, %v2661
  %2728 = vst.msk [vmem:[%s5 + $0x118] sm:$0xff] %vm2692, %v2662
  %2729 = vst.msk [vmem:[%s5 + $0x120] sm:$0xff] %vm2692, %v2663
  %2730 = vst.msk [vmem:[%s5 + $0x128] sm:$0xff] %vm2692, %v2664
  %2731 = vst.msk [vmem:[%s5 + $0x130] sm:$0xff] %vm2692, %v2665
  %2732 = vst.msk [vmem:[%s5 + $0x138] sm:$0xff] %vm2692, %v2666
  %2733 = vst.msk [vmem:[%s5 + $0x140] sm:$0xff] %vm2692, %v2667
  %2734 = vst.msk [vmem:[%s5 + $0x148] sm:$0xff] %vm2692, %v2668
  %2735 = vst.msk [vmem:[%s5 + $0x150] sm:$0xff] %vm2692, %v2669
  %2736 = vst.msk [vmem:[%s5 + $0x158] sm:$0xff] %vm2692, %v2670
  %2737 = vst.msk [vmem:[%s5 + $0x160] sm:$0xff] %vm2692, %v2671
  %2738 = vst.msk [vmem:[%s5 + $0x168] sm:$0xff] %vm2692, %v2672
  %2739 = vst.msk [vmem:[%s5 + $0x170] sm:$0xff] %vm2692, %v2673
  %2740 = vst.msk [vmem:[%s5 + $0x178] sm:$0xff] %vm2692, %v2674
  %2741 = vst.msk [vmem:[%s5 + $0x180] sm:$0xff] %vm2692, %v2675
  %2742 = vst.msk [vmem:[%s5 + $0x188] sm:$0xff] %vm2692, %v2676
  %2743 = vst.msk [vmem:[%s5 + $0x190] sm:$0xff] %vm2692, %v2677
  %2744 = vst.msk [vmem:[%s5 + $0x198] sm:$0xff] %vm2692, %v2678
  %2745 = vst.msk [vmem:[%s5 + $0x1a0] sm:$0xff] %vm2692, %v2679
  %2746 = vst.msk [vmem:[%s5 + $0x1a8] sm:$0xff] %vm2692, %v2680
  %2747 = vst.msk [vmem:[%s5 + $0x1b0] sm:$0xff] %vm2692, %v2681
  %2748 = vst.msk [vmem:[%s5 + $0x1b8] sm:$0xff] %vm2692, %v2682
  %2749 = vst.msk [vmem:[%s5 + $0x1c0] sm:$0xff] %vm2692, %v2683
  %2750 = vst.msk [vmem:[%s5 + $0x1c8] sm:$0xff] %vm2692, %v2684
  %2751 = vst.msk [vmem:[%s5 + $0x1d0] sm:$0xff] %vm2692, %v2685
  %2752 = vst.msk [vmem:[%s5 + $0x1d8] sm:$0xff] %vm2692, %v2686
  %2753 = vst.msk [vmem:[%s5 + $0x1e0] sm:$0xff] %vm2692, %v2687
  %2754 = vst.msk [vmem:[%s5 + $0x1e8] sm:$0xff] %vm2692, %v2688
  %2755 = vst.msk [vmem:[%s5 + $0x1f0] sm:$0xff] %vm2692, %v2689
  %2756 = vst.msk [vmem:[%s5 + $0x1f8] sm:$0xff] %vm2692, %v2690
  %2757 = vst.msk [vmem:[%s5 + $0x200] sm:$0xff] %vm2692, %v2691
  // Predicated region
  $region22: #{_gw_graph_conv_impl.1} parent=0 // pred_check
    _
  $region23: #{_gw_graph_conv_impl.1} parent=0 // pred_check_branch
    %2759 = sbr.rel (0) target = $region25
  $region24: #{_gw_graph_conv_impl.1} parent=0 // pred_region
    _
  $region25: #{_gw_graph_conv_impl.1} parent=0 // pred_fallthru
    _
  // Predicated region
  $region26: #{_gw_graph_conv_impl.1} parent=0 // pred_check
    _
  $region27: #{_gw_graph_conv_impl.1} parent=0 // pred_check_branch
    %2761 = sbr.rel (0) target = $region29
  $region28: #{_gw_graph_conv_impl.1} parent=0 // pred_region
    _
  $region29: #{_gw_graph_conv_impl.1} parent=0 // pred_fallthru
    _

</llo_original>
